<compile_context>
chip_gen: v7x
topology: tpu7x:2x2x1
jax: 0.10.0
libtpu: 0.0.40
codegen_flags: <defaults>
</compile_context>

<pallas_src>
from functools import partial

import numpy as np
import jax
import jax.numpy as jnp
from jax.experimental import pallas as pl
from jax.experimental.pallas import tpu as pltpu


# ----------------------------------------------------------------------------
# Static architecture dimensions (from the PyTorch module)
# ----------------------------------------------------------------------------
C_IN, H_IN, W_IN = 3, 16, 16
C1, K1 = 4, 5
H1, W1S = H_IN - K1 + 1, W_IN - K1 + 1          # 12, 12 (conv1 output)
P = 7                                            # AdaptiveAvgPool2d((7, 7))
C2, K2 = 12, 5
H2, W2S = P - K2 + 1, P - K2 + 1                 # 3, 3 (conv2 output)
N_CLASSES = 10


def _round_up(n, m):
    return ((n + m - 1) // m) * m


K_IN    = C_IN * H_IN * W_IN                     # 768  (flattened NCHW input)
COLS_A  = H1 * W1S * C1                          # 576  (conv1 out, (i,j,oc))
COLS_B  = H2 * W2S * C2                          # 108  (conv2 out, (y,x,d))
H1_PAD  = _round_up(COLS_A, 128)                 # 640
H2_PAD  = _round_up(COLS_B, 128)                 # 128
OUT_PAD = _round_up(N_CLASSES, 128)              # 128


# ----------------------------------------------------------------------------
# Host-side constant folding (done once at init)
# ----------------------------------------------------------------------------
def adaptive_pool_matrix(in_size, out_size):
    """Row-stochastic (out, in) matrix reproducing PyTorch AdaptiveAvgPool bins."""
    A = np.zeros((out_size, in_size), dtype=np.float32)
    for i in range(out_size):
        s = (i * in_size) // out_size
        e = -((-((i + 1) * in_size)) // out_size)    # ceil
        A[i, s:e] = 1.0 / (e - s)
    return A


def precompute_folded_params(params):
    """Fold conv1/im2col, pool1+conv2, pool2+flatten+dense into 3 dense mats.

    Weights are returned in bfloat16 (MXU-native operands); biases in float32
    (added to the f32 matmul accumulator).
    """
    w1 = np.asarray(params["w1"], np.float32)        # (4, 3, 5, 5)
    b1 = np.asarray(params["b1"], np.float32)        # (4,)
    w2 = np.asarray(params["w2"], np.float32)        # (12, 4, 5, 5)
    b2 = np.asarray(params["b2"], np.float32)        # (12,)
    wd = np.asarray(params["wd"], np.float32)        # (10, 588)
    bd = np.asarray(params["bd"], np.float32)        # (10,)

    # --- stage A: conv1 on the flattened NCHW input -------------------------
    # column index col_A(i, j, oc) = (i*12 + j)*4 + oc
    W1big = np.zeros((K_IN, COLS_A), np.float32)
    for i in range(H1):
        for j in range(W1S):
            col = (i * W1S + j) * C1
            for p in range(K1):
                for q in range(K1):
                    for c in range(C_IN):
                        row = c * (H_IN * W_IN) + (i + p) * W_IN + (j + q)
                        W1big[row, col:col + C1] = w1[:, c, p, q]
    b1big = np.tile(b1, H1 * W1S)                                   # (576,)

    # --- stage B: pool1 + conv2 ----------------------------------------------
    # column index col_B(y, x, d) = (y*3 + x)*12 + d
    Ah1 = adaptive_pool_matrix(H1, P)                               # (7, 12)
    A1full = np.einsum("ui,vj->uvij", Ah1, Ah1)                     # (7,7,12,12)
    W2eff = np.zeros((COLS_A, COLS_B), np.float32)
    for y in range(H2):
        for xx in range(W2S):
            patch = A1full[y:y + K2, xx:xx + K2]                    # (5,5,12,12)
            block = np.einsum("dopq,pqij->ijod", w2, patch)         # (12,12,4,12)
            c0 = (y * W2S + xx) * C2
            W2eff[:, c0:c0 + C2] = block.reshape(COLS_A, C2)
    b2eff = np.tile(b2, H2 * W2S)                                   # (108,)

    # --- stage C: pool2 + flatten + dense ------------------------------------
    Ah2 = adaptive_pool_matrix(H2, P)                               # (7, 3)
    wd4 = wd.reshape(N_CLASSES, C2, P, P)
    Wdeff = np.einsum("oduv,uy,vx->yxdo", wd4, Ah2, Ah2)            # (3,3,12,10)
    Wdeff = Wdeff.reshape(COLS_B, N_CLASSES)

    # zero-pad everything to lane-dense (multiples of 128) widths — exact.
    def pad2(m, r, c):
        out = np.zeros((r, c), np.float32)
        out[:m.shape[0], :m.shape[1]] = m
        return out

    def pad_bias(v, n):
        out = np.zeros((1, n), np.float32)
        out[0, :v.shape[0]] = v
        return out

    return dict(
        w1=jnp.asarray(pad2(W1big, K_IN, H1_PAD), jnp.bfloat16),    # (768, 640)
        b1=jnp.asarray(pad_bias(b1big, H1_PAD), jnp.float32),       # (1, 640)
        w2=jnp.asarray(pad2(W2eff, H1_PAD, H2_PAD), jnp.bfloat16),  # (640, 128)
        b2=jnp.asarray(pad_bias(b2eff, H2_PAD), jnp.float32),       # (1, 128)
        wd=jnp.asarray(pad2(Wdeff, H2_PAD, OUT_PAD), jnp.bfloat16), # (128, 128)
        bd=jnp.asarray(pad_bias(bd, OUT_PAD), jnp.float32),         # (1, 128)
    )


# ----------------------------------------------------------------------------
# Fused Pallas kernel: whole network on one batch-row tile
# ----------------------------------------------------------------------------
def _lenet_fused_kernel(x_ref, w1_ref, b1_ref, w2_ref, b2_ref,
                        wd_ref, bd_ref, o_ref):
    # conv1 (+ bias + tanh); bf16 x bf16 -> f32 accumulate, epilogue in f32.
    h1 = jnp.tanh(
        jnp.dot(x_ref[...], w1_ref[...], preferred_element_type=jnp.float32)
        + b1_ref[...])
    # pool1 + conv2 (+ bias + tanh)
    h2 = jnp.tanh(
        jnp.dot(h1.astype(jnp.bfloat16), w2_ref[...],
                preferred_element_type=jnp.float32)
        + b2_ref[...])
    # pool2 + flatten + dense (+ bias)
    o_ref[...] = (
        jnp.dot(h2.astype(jnp.bfloat16), wd_ref[...],
                preferred_element_type=jnp.float32)
        + bd_ref[...]).astype(o_ref.dtype)


def _choose_row_tile(n, row_tile):
    """Static batch-row tile TM.

    Small batch: one sublane-aligned tile covering the whole (padded) batch.
    Large batch: MXU-friendly multiple of 128 (256 fills the v6e/v7x MXU),
    shrunk if needed so the grid has >=2 steps and both v7x TCs get work.
    """
    n8 = _round_up(max(n, 1), 8)
    if n8 <= 128:
        return n8
    tm = min(_round_up(row_tile, 128), _round_up(n, 128))
    while tm > 128 and (n + tm - 1) // tm < 2:
        tm -= 128
    return tm


def default_row_tile():
    """128 on v5e (4x128 MXU, 16 MiB scoped VMEM), 256 on v6e/v7x."""
    try:
        kind = jax.devices()[0].device_kind.lower()
    except Exception:
        return 256
    if "v5 lite" in kind or "v5e" in kind or "v5lite" in kind:
        return 128
    return 256


@partial(jax.jit, static_argnames=("row_tile",))
def lenet_forward_pallas(x, consts, *, row_tile=256):
    N = x.shape[0]
    # Cast to bf16 once at the boundary; NCHW flatten is a free view.
    xf = x.astype(jnp.bfloat16).reshape(N, K_IN)          # (N, 768)

    TM = _choose_row_tile(N, row_tile)
    steps = (N + TM - 1) // TM
    Np = steps * TM
    if Np != N:
        # Ragged tail only; XLA fuses this pad with the bf16 cast above
        # (single write pass).  When TM divides N there is no pad at all.
        xf = jnp.pad(xf, ((0, Np - N), (0, 0)))

    flops = 2 * Np * (K_IN * H1_PAD + H1_PAD * H2_PAD + H2_PAD * OUT_PAD)
    transcendentals = Np * (H1_PAD + H2_PAD)
    bytes_accessed = (
        Np * K_IN * 2                                           # bf16 input
        + (K_IN * H1_PAD + H1_PAD * H2_PAD + H2_PAD * OUT_PAD) * 2   # bf16 weights
        + (H1_PAD + H2_PAD + OUT_PAD) * 4                       # f32 biases
        + Np * OUT_PAD * 4)                                     # f32 output

    out = pl.pallas_call(
        _lenet_fused_kernel,
        out_shape=jax.ShapeDtypeStruct((Np, OUT_PAD), jnp.float32),
        grid=(steps,),
        in_specs=[
            pl.BlockSpec((TM, K_IN),        lambda i: (i, 0)),
            pl.BlockSpec((K_IN, H1_PAD),    lambda i: (0, 0)),
            pl.BlockSpec((1, H1_PAD),       lambda i: (0, 0)),
            pl.BlockSpec((H1_PAD, H2_PAD),  lambda i: (0, 0)),
            pl.BlockSpec((1, H2_PAD),       lambda i: (0, 0)),
            pl.BlockSpec((H2_PAD, OUT_PAD), lambda i: (0, 0)),
            pl.BlockSpec((1, OUT_PAD),      lambda i: (0, 0)),
        ],
        out_specs=pl.BlockSpec((TM, OUT_PAD), lambda i: (i, 0)),
        compiler_params=pltpu.CompilerParams(
            dimension_semantics=("parallel",)),
        cost_estimate=pl.CostEstimate(
            flops=flops, transcendentals=transcendentals,
            bytes_accessed=bytes_accessed),
    )(xf, consts["w1"], consts["b1"], consts["w2"], consts["b2"],
      consts["wd"], consts["bd"])

    return out[:N, :N_CLASSES]


# ----------------------------------------------------------------------------
# Pure-JAX f32 reference (for correctness check)
# ----------------------------------------------------------------------------
def lenet_forward_ref(x, params):
    def conv(x, w, b):
        y = jax.lax.conv_general_dilated(
            x, w, window_strides=(1, 1), padding="VALID",
            dimension_numbers=("NCHW", "OIHW", "NCHW"))
        return y + b[None, :, None, None]

    def apool(x, out=7):
        _, _, H, W = x.shape
        Ah = jnp.asarray(adaptive_pool_matrix(H, out))
        Aw = jnp.asarray(adaptive_pool_matrix(W, out))
        return jnp.einsum("nchw,ih,jw->ncij", x, Ah, Aw)

    h = jnp.tanh(conv(x, params["w1"], params["b1"]))
    h = apool(h)
    h = jnp.tanh(conv(h, params["w2"], params["b2"]))
    h = apool(h)
    h = h.reshape(h.shape[0], -1)
    return h @ params["wd"].T + params["bd"]


# ----------------------------------------------------------------------------
if __name__ == "__main__":
    key = jax.random.PRNGKey(0)
    kx, k1, k2, k3, k4, k5, k6 = jax.random.split(key, 7)

    # batch=2, 3-channel 16x16 input
    # (conv1 -> 12x12 -> pool 7x7 -> conv2 -> 3x3 -> pool 7x7 -> dense 10)
    x = jax.random.normal(kx, (2, C_IN, H_IN, W_IN), jnp.float32)

    def uinit(k, shape, fan_in):
        bound = 1.0 / np.sqrt(fan_in)
        return jax.random.uniform(k, shape, jnp.float32, -bound, bound)

    params = dict(
        w1=uinit(k1, (C1, C_IN, K1, K1), C_IN * K1 * K1),
        b1=uinit(k2, (C1,), C_IN * K1 * K1),
        w2=uinit(k3, (C2, C1, K2, K2), C1 * K2 * K2),
        b2=uinit(k4, (C2,), C1 * K2 * K2),
        wd=uinit(k5, (N_CLASSES, C2 * P * P), C2 * P * P),
        bd=uinit(k6, (N_CLASSES,), C2 * P * P),
    )

    # Constants folded once at init (cached alongside the params in practice).
    consts = precompute_folded_params(params)

    out = lenet_forward_pallas(x, consts, row_tile=default_row_tile())
    out = jax.block_until_ready(out)
    assert out.shape == (2, N_CLASSES), out.shape

    # bf16 matmul operands vs f32 reference -> loosened tolerance.
    ref = lenet_forward_ref(x, params)
    np.testing.assert_allclose(np.asarray(out), np.asarray(ref),
                               rtol=2e-2, atol=2e-2)
    print("KERNEL_OK")
</pallas_src>

<mosaic_0001>
module attributes {stable_mosaic.version = 11 : i64} {
  func.func @_lenet_fused_kernel(%arg0: i32, %arg1: memref<8x768xbf16, #tpu.memory_space<vmem>>, %arg2: memref<768x640xbf16, #tpu.memory_space<vmem>>, %arg3: memref<1x640xf32, #tpu.memory_space<vmem>>, %arg4: memref<640x128xbf16, #tpu.memory_space<vmem>>, %arg5: memref<1x128xf32, #tpu.memory_space<vmem>>, %arg6: memref<128x128xbf16, #tpu.memory_space<vmem>>, %arg7: memref<1x128xf32, #tpu.memory_space<vmem>>, %arg8: memref<8x128xf32, #tpu.memory_space<vmem>>) attributes {dimension_semantics = [#tpu.dimension_semantics<parallel>], iteration_bounds = array<i64: 1>, scalar_prefetch = 0 : i64, scratch_operands = 0 : i64, tpu.core_type = #tpu.core_type<tc>, window_params = [{transform_indices = @transform_0, window_bounds = array<i64: 8, 768>}, {pipeline_mode = #tpu.pipeline_mode<synchronous>, transform_indices = @transform_1, window_bounds = array<i64: 768, 640>}, {pipeline_mode = #tpu.pipeline_mode<synchronous>, transform_indices = @transform_2, window_bounds = array<i64: 1, 640>}, {pipeline_mode = #tpu.pipeline_mode<synchronous>, transform_indices = @transform_3, window_bounds = array<i64: 640, 128>}, {pipeline_mode = #tpu.pipeline_mode<synchronous>, transform_indices = @transform_4, window_bounds = array<i64: 1, 128>}, {pipeline_mode = #tpu.pipeline_mode<synchronous>, transform_indices = @transform_5, window_bounds = array<i64: 128, 128>}, {pipeline_mode = #tpu.pipeline_mode<synchronous>, transform_indices = @transform_6, window_bounds = array<i64: 1, 128>}, {transform_indices = @transform_7, window_bounds = array<i64: 8, 128>}]} {
    %c0 = arith.constant 0 : index
    %c0_0 = arith.constant 0 : index
    %0 = vector.load %arg1[%c0, %c0_0] : memref<8x768xbf16, #tpu.memory_space<vmem>>, vector<8x768xbf16>
    %c0_1 = arith.constant 0 : index
    %c0_2 = arith.constant 0 : index
    %1 = vector.load %arg2[%c0_1, %c0_2] : memref<768x640xbf16, #tpu.memory_space<vmem>>, vector<768x640xbf16>
    %cst = arith.constant dense<0.000000e+00> : vector<8x640xf32>
    %2 = tpu.matmul %0, %1, %cst {dimension_numbers = #tpu.dot_dimension_numbers<[1], [0], [0], [1], [0, 0, 1, 1], [], []>} : vector<8x768xbf16>, vector<768x640xbf16>, vector<8x640xf32> -> vector<8x640xf32>
    %c0_3 = arith.constant 0 : index
    %c0_4 = arith.constant 0 : index
    %3 = vector.load %arg3[%c0_3, %c0_4] : memref<1x640xf32, #tpu.memory_space<vmem>>, vector<1x640xf32>
    %4 = vector.broadcast %3 : vector<1x640xf32> to vector<8x640xf32>
    %5 = arith.addf %2, %4 : vector<8x640xf32>
    %6 = math.tanh %5 : vector<8x640xf32>
    %7 = arith.truncf %6 : vector<8x640xf32> to vector<8x640xbf16>
    %c0_5 = arith.constant 0 : index
    %c0_6 = arith.constant 0 : index
    %8 = vector.load %arg4[%c0_5, %c0_6] : memref<640x128xbf16, #tpu.memory_space<vmem>>, vector<640x128xbf16>
    %cst_7 = arith.constant dense<0.000000e+00> : vector<8x128xf32>
    %9 = tpu.matmul %7, %8, %cst_7 {dimension_numbers = #tpu.dot_dimension_numbers<[1], [0], [0], [1], [0, 0, 1, 1], [], []>} : vector<8x640xbf16>, vector<640x128xbf16>, vector<8x128xf32> -> vector<8x128xf32>
    %c0_8 = arith.constant 0 : index
    %c0_9 = arith.constant 0 : index
    %10 = vector.load %arg5[%c0_8, %c0_9] : memref<1x128xf32, #tpu.memory_space<vmem>>, vector<1x128xf32>
    %11 = vector.broadcast %10 : vector<1x128xf32> to vector<8x128xf32>
    %12 = arith.addf %9, %11 : vector<8x128xf32>
    %13 = math.tanh %12 : vector<8x128xf32>
    %14 = arith.truncf %13 : vector<8x128xf32> to vector<8x128xbf16>
    %c0_10 = arith.constant 0 : index
    %c0_11 = arith.constant 0 : index
    %15 = vector.load %arg6[%c0_10, %c0_11] : memref<128x128xbf16, #tpu.memory_space<vmem>>, vector<128x128xbf16>
    %cst_12 = arith.constant dense<0.000000e+00> : vector<8x128xf32>
    %16 = tpu.matmul %14, %15, %cst_12 {dimension_numbers = #tpu.dot_dimension_numbers<[1], [0], [0], [1], [0, 0, 1, 1], [], []>} : vector<8x128xbf16>, vector<128x128xbf16>, vector<8x128xf32> -> vector<8x128xf32>
    %c0_13 = arith.constant 0 : index
    %c0_14 = arith.constant 0 : index
    %17 = vector.load %arg7[%c0_13, %c0_14] : memref<1x128xf32, #tpu.memory_space<vmem>>, vector<1x128xf32>
    %18 = vector.broadcast %17 : vector<1x128xf32> to vector<8x128xf32>
    %19 = arith.addf %16, %18 : vector<8x128xf32>
    %c0_15 = arith.constant 0 : index
    %c0_16 = arith.constant 0 : index
    %20 = vector.load %arg8[%c0_15, %c0_16] : memref<8x128xf32, #tpu.memory_space<vmem>>, vector<8x128xf32>
    tpu.vector_store %arg8[%c0_15, %c0_16], %19 {strides = array<i32>} : memref<8x128xf32, #tpu.memory_space<vmem>>, vector<8x128xf32>,
    return
  }
  func.func @transform_0(%arg0: i32) -> (i32, i32) {
    %c0_i32 = arith.constant 0 : i32
    %c0_i32_0 = arith.constant 0 : i32
    return %arg0, %c0_i32 : i32, i32
  }
  func.func @transform_1(%arg0: i32) -> (i32, i32) {
    %c0_i32 = arith.constant 0 : i32
    %c0_i32_0 = arith.constant 0 : i32
    %c0_i32_1 = arith.constant 0 : i32
    return %c0_i32, %c0_i32_0 : i32, i32
  }
  func.func @transform_2(%arg0: i32) -> (i32, i32) {
    %c0_i32 = arith.constant 0 : i32
    %c0_i32_0 = arith.constant 0 : i32
    %c0_i32_1 = arith.constant 0 : i32
    return %c0_i32, %c0_i32_0 : i32, i32
  }
  func.func @transform_3(%arg0: i32) -> (i32, i32) {
    %c0_i32 = arith.constant 0 : i32
    %c0_i32_0 = arith.constant 0 : i32
    %c0_i32_1 = arith.constant 0 : i32
    return %c0_i32, %c0_i32_0 : i32, i32
  }
  func.func @transform_4(%arg0: i32) -> (i32, i32) {
    %c0_i32 = arith.constant 0 : i32
    %c0_i32_0 = arith.constant 0 : i32
    %c0_i32_1 = arith.constant 0 : i32
    return %c0_i32, %c0_i32_0 : i32, i32
  }
  func.func @transform_5(%arg0: i32) -> (i32, i32) {
    %c0_i32 = arith.constant 0 : i32
    %c0_i32_0 = arith.constant 0 : i32
    %c0_i32_1 = arith.constant 0 : i32
    return %c0_i32, %c0_i32_0 : i32, i32
  }
  func.func @transform_6(%arg0: i32) -> (i32, i32) {
    %c0_i32 = arith.constant 0 : i32
    %c0_i32_0 = arith.constant 0 : i32
    %c0_i32_1 = arith.constant 0 : i32
    return %c0_i32, %c0_i32_0 : i32, i32
  }
  func.func @transform_7(%arg0: i32) -> (i32, i32) {
    %c0_i32 = arith.constant 0 : i32
    %c0_i32_0 = arith.constant 0 : i32
    return %arg0, %c0_i32 : i32, i32
  }
}

</mosaic_0001>

<llo_original>
// kernel: lenet_forward_pallas.1
$region0: #{lenet_forward_pallas.1}
  #allocation0 [shape = 'u32[]', space=smem, size = 0x4, offset = 0x4, fixed_abs, tag = 'smem constant byte address 0x4 - core index']
  #allocation1 [shape = 'u32[144,128]{1,0:T(1,128)}', space=vmem, size = 0x12000, scoped, tag = 'internal scratch']
  %s0 = inlined_call_operand.vmem [shape: bf16[8,768], index: 0, kind: input, shape index: {}]
  %s1 = inlined_call_operand.hbm [shape: bf16[768,640], index: 1, kind: input, shape index: {}]
  %s2 = inlined_call_operand.vmem [shape: f32[1,640], index: 2, kind: input, shape index: {}]
  %s3 = inlined_call_operand.hbm [shape: bf16[640,128], index: 3, kind: input, shape index: {}]
  %s4 = inlined_call_operand.vmem [shape: f32[1,128], index: 4, kind: input, shape index: {}]
  %s5 = inlined_call_operand.vmem [shape: bf16[128,128], index: 5, kind: input, shape index: {}]
  %s6 = inlined_call_operand.vmem [shape: f32[1,128], index: 6, kind: input, shape index: {}]
  %s7 = inlined_call_operand.vmem [shape: f32[8,128], index: 7, kind: output, shape index: {}]
  %s8 = sld [smem:[#allocation0]]
  $region46: #{lenet_forward_pallas.1} parent=0
    _
  %s10 = ssub.s32 1, %s8
  %s11 = scalar_select 0, %s10, %s8
  $region1: #{lenet_forward_pallas.1} parent=0
    #allocation2 [shape = 'u8[983040]{0}', space=vmem, size = 0xf0000, scoped, tag = 'input window, operand 1, single buffered']
    #allocation3 [shape = 's32[1]{0}', space=sflag, size = 0x4, scoped, tag = 'scoped memory for lenet_forward_pallas.1']
    #allocation4 [shape = 'u8[163840]{0}', space=vmem, size = 0x28000, scoped, tag = 'input window, operand 3, single buffered']
    #allocation5 [shape = 's32[1]{0}', space=sflag, size = 0x4, scoped, tag = 'scoped memory for lenet_forward_pallas.1']
    %12 = vsyncpa [#allocation3], 0
    %13 = vsyncpa [#allocation5], 0
    // Predicated region
    $region2: #{lenet_forward_pallas.1} parent=1 // pred_check
      _
    $region3: #{lenet_forward_pallas.1} parent=1 // pred_check_branch
      %15 = sbr.rel (0) target = $region5
    $region4: #{lenet_forward_pallas.1} parent=1 // pred_region
      _
    $region5: #{lenet_forward_pallas.1} parent=1 // pred_fallthru
      _
    // Predicated region
    $region6: #{lenet_forward_pallas.1} parent=1 // pred_check
      _
    $region7: #{lenet_forward_pallas.1} parent=1 // pred_check_branch
      %17 = sbr.rel (0) target = $region9
    $region8: #{lenet_forward_pallas.1} parent=1 // pred_region
      %s19 = ssub.s32 30720, 30720
      %20 = vsyncadd [#allocation3], %s19
      %s21 = sshll.u32 [#allocation2], 4
      %s22 = int_to_ptr.vmem [resolvable:$true] %s21
      %27 = dma.hbm_to_vmem [thread:$0]  %s1, 30720, %s22, [#allocation3], 320, 320, 20
    $region9: #{lenet_forward_pallas.1} parent=1 // pred_fallthru
      _
    // Predicated region
    $region10: #{lenet_forward_pallas.1} parent=1 // pred_check
      _
    $region11: #{lenet_forward_pallas.1} parent=1 // pred_check_branch
      %29 = sbr.rel (0) target = $region13
    $region12: #{lenet_forward_pallas.1} parent=1 // pred_region
      _
    $region13: #{lenet_forward_pallas.1} parent=1 // pred_fallthru
      _
    // Predicated region
    $region14: #{lenet_forward_pallas.1} parent=1 // pred_check
      _
    $region15: #{lenet_forward_pallas.1} parent=1 // pred_check_branch
      %31 = sbr.rel (0) target = $region17
    $region16: #{lenet_forward_pallas.1} parent=1 // pred_region
      %s33 = ssub.s32 5120, 5120
      %34 = vsyncadd [#allocation5], %s33
      %s35 = sshll.u32 [#allocation4], 4
      %s36 = int_to_ptr.vmem [resolvable:$true] %s35
      %41 = dma.hbm_to_vmem [thread:$0]  %s3, 5120, %s36, [#allocation5], 64, 64, 4
    $region17: #{lenet_forward_pallas.1} parent=1 // pred_fallthru
      _
    // Predicated region
    $region18: #{lenet_forward_pallas.1} parent=1 // pred_check
      _
    $region19: #{lenet_forward_pallas.1} parent=1 // pred_check_branch
      %43 = sbr.rel (0) target = $region21
    $region20: #{lenet_forward_pallas.1} parent=1 // pred_region
      _
    $region21: #{lenet_forward_pallas.1} parent=1 // pred_fallthru
      _
    // Predicated region
    $region22: #{lenet_forward_pallas.1} parent=1 // pred_check
      _
    $region23: #{lenet_forward_pallas.1} parent=1 // pred_check_branch
      %45 = sbr.rel (0) target = $region25
    $region24: #{lenet_forward_pallas.1} parent=1 // pred_region
      _
    $region25: #{lenet_forward_pallas.1} parent=1 // pred_fallthru
      _
    // Predicated region
    $region26: #{lenet_forward_pallas.1} parent=1 // pred_check
      _
    $region27: #{lenet_forward_pallas.1} parent=1 // pred_check_branch
      %47 = sbr.rel (0) target = $region29
    $region28: #{lenet_forward_pallas.1} parent=1 // pred_region
      _
    $region29: #{lenet_forward_pallas.1} parent=1 // pred_fallthru
      _
    // Predicated region
    $region30: #{lenet_forward_pallas.1} parent=1 // pred_check
      _
    $region31: #{lenet_forward_pallas.1} parent=1 // pred_check_branch
      %49 = sbr.rel (0) target = $region33
    $region32: #{lenet_forward_pallas.1} parent=1 // pred_region
      %50 = dma.done [#allocation3], 30720
    $region33: #{lenet_forward_pallas.1} parent=1 // pred_fallthru
      _
    // Predicated region
    $region34: #{lenet_forward_pallas.1} parent=1 // pred_check
      _
    $region35: #{lenet_forward_pallas.1} parent=1 // pred_check_branch
      %52 = sbr.rel (0) target = $region37
    $region36: #{lenet_forward_pallas.1} parent=1 // pred_region
      %53 = dma.done [#allocation5], 5120
    $region37: #{lenet_forward_pallas.1} parent=1 // pred_fallthru
      _
    %v55 = vld [vmem:[%s0] sm:$0xff]
    %v56 = vld [vmem:[%s0 + $0x8] sm:$0xff]
    %v57 = vld [vmem:[%s0 + $0x10] sm:$0xff]
    %v58 = vld [vmem:[#allocation2] sm:$0xff]
    %v59 = vld [vmem:[#allocation2 + $0x8] sm:$0xff]
    %v60 = vld [vmem:[#allocation2 + $0x10] sm:$0xf]
    %v61 = vld [vmem:[#allocation2 + $0x14] sm:$0xff]
    %v62 = vld [vmem:[#allocation2 + $0x1c] sm:$0xff]
    %v63 = vld [vmem:[#allocation2 + $0x24] sm:$0xf]
    %v64 = vld [vmem:[#allocation2 + $0x28] sm:$0xff]
    %v65 = vld [vmem:[#allocation2 + $0x30] sm:$0xff]
    %v66 = vld [vmem:[#allocation2 + $0x38] sm:$0xf]
    %v67 = vld [vmem:[#allocation2 + $0x3c] sm:$0xff]
    %v68 = vld [vmem:[#allocation2 + $0x44] sm:$0xff]
    %v69 = vld [vmem:[#allocation2 + $0x4c] sm:$0xf]
    %v70 = vld [vmem:[#allocation2 + $0x50] sm:$0xff]
    %v71 = vld [vmem:[#allocation2 + $0x58] sm:$0xff]
    %v72 = vld [vmem:[#allocation2 + $0x60] sm:$0xf]
    %v73 = vld [vmem:[#allocation2 + $0x64] sm:$0xff]
    %v74 = vld [vmem:[#allocation2 + $0x6c] sm:$0xff]
    %v75 = vld [vmem:[#allocation2 + $0x74] sm:$0xf]
    %v76 = vld [vmem:[#allocation2 + $0x78] sm:$0xff]
    %v77 = vld [vmem:[#allocation2 + $0x80] sm:$0xff]
    %v78 = vld [vmem:[#allocation2 + $0x88] sm:$0xf]
    %v79 = vld [vmem:[#allocation2 + $0x8c] sm:$0xff]
    %v80 = vld [vmem:[#allocation2 + $0x94] sm:$0xff]
    %v81 = vld [vmem:[#allocation2 + $0x9c] sm:$0xf]
    %v82 = vld [vmem:[#allocation2 + $0xa0] sm:$0xff]
    %v83 = vld [vmem:[#allocation2 + $0xa8] sm:$0xff]
    %v84 = vld [vmem:[#allocation2 + $0xb0] sm:$0xf]
    %v85 = vld [vmem:[#allocation2 + $0xb4] sm:$0xff]
    %v86 = vld [vmem:[#allocation2 + $0xbc] sm:$0xff]
    %v87 = vld [vmem:[#allocation2 + $0xc4] sm:$0xf]
    %v88 = vld [vmem:[#allocation2 + $0xc8] sm:$0xff]
    %v89 = vld [vmem:[#allocation2 + $0xd0] sm:$0xff]
    %v90 = vld [vmem:[#allocation2 + $0xd8] sm:$0xf]
    %v91 = vld [vmem:[#allocation2 + $0xdc] sm:$0xff]
    %v92 = vld [vmem:[#allocation2 + $0xe4] sm:$0xff]
    %v93 = vld [vmem:[#allocation2 + $0xec] sm:$0xf]
    %v94 = vld [vmem:[#allocation2 + $0xf0] sm:$0xff]
    %v95 = vld [vmem:[#allocation2 + $0xf8] sm:$0xff]
    %v96 = vld [vmem:[#allocation2 + $0x100] sm:$0xf]
    %v97 = vld [vmem:[#allocation2 + $0x104] sm:$0xff]
    %v98 = vld [vmem:[#allocation2 + $0x10c] sm:$0xff]
    %v99 = vld [vmem:[#allocation2 + $0x114] sm:$0xf]
    %v100 = vld [vmem:[#allocation2 + $0x118] sm:$0xff]
    %v101 = vld [vmem:[#allocation2 + $0x120] sm:$0xff]
    %v102 = vld [vmem:[#allocation2 + $0x128] sm:$0xf]
    %v103 = vld [vmem:[#allocation2 + $0x12c] sm:$0xff]
    %v104 = vld [vmem:[#allocation2 + $0x134] sm:$0xff]
    %v105 = vld [vmem:[#allocation2 + $0x13c] sm:$0xf]
    %v106 = vld [vmem:[#allocation2 + $0x140] sm:$0xff]
    %v107 = vld [vmem:[#allocation2 + $0x148] sm:$0xff]
    %v108 = vld [vmem:[#allocation2 + $0x150] sm:$0xf]
    %v109 = vld [vmem:[#allocation2 + $0x154] sm:$0xff]
    %v110 = vld [vmem:[#allocation2 + $0x15c] sm:$0xff]
    %v111 = vld [vmem:[#allocation2 + $0x164] sm:$0xf]
    %v112 = vld [vmem:[#allocation2 + $0x168] sm:$0xff]
    %v113 = vld [vmem:[#allocation2 + $0x170] sm:$0xff]
    %v114 = vld [vmem:[#allocation2 + $0x178] sm:$0xf]
    %v115 = vld [vmem:[#allocation2 + $0x17c] sm:$0xff]
    %v116 = vld [vmem:[#allocation2 + $0x184] sm:$0xff]
    %v117 = vld [vmem:[#allocation2 + $0x18c] sm:$0xf]
    %v118 = vld [vmem:[#allocation2 + $0x190] sm:$0xff]
    %v119 = vld [vmem:[#allocation2 + $0x198] sm:$0xff]
    %v120 = vld [vmem:[#allocation2 + $0x1a0] sm:$0xf]
    %v121 = vld [vmem:[#allocation2 + $0x1a4] sm:$0xff]
    %v122 = vld [vmem:[#allocation2 + $0x1ac] sm:$0xff]
    %v123 = vld [vmem:[#allocation2 + $0x1b4] sm:$0xf]
    %v124 = vld [vmem:[#allocation2 + $0x1b8] sm:$0xff]
    %v125 = vld [vmem:[#allocation2 + $0x1c0] sm:$0xff]
    %v126 = vld [vmem:[#allocation2 + $0x1c8] sm:$0xf]
    %v127 = vld [vmem:[#allocation2 + $0x1cc] sm:$0xff]
    %v128 = vld [vmem:[#allocation2 + $0x1d4] sm:$0xff]
    %v129 = vld [vmem:[#allocation2 + $0x1dc] sm:$0xf]
    %v130 = vld [vmem:[#allocation2 + $0x1e0] sm:$0xff]
    %v131 = vld [vmem:[#allocation2 + $0x1e8] sm:$0xff]
    %v132 = vld [vmem:[#allocation2 + $0x1f0] sm:$0xf]
    %v133 = vld [vmem:[#allocation2 + $0x1f4] sm:$0xff]
    %v134 = vld [vmem:[#allocation2 + $0x1fc] sm:$0xff]
    %v135 = vld [vmem:[#allocation2 + $0x204] sm:$0xf]
    %v136 = vld [vmem:[#allocation2 + $0x208] sm:$0xff]
    %v137 = vld [vmem:[#allocation2 + $0x210] sm:$0xff]
    %v138 = vld [vmem:[#allocation2 + $0x218] sm:$0xf]
    %v139 = vld [vmem:[#allocation2 + $0x21c] sm:$0xff]
    %v140 = vld [vmem:[#allocation2 + $0x224] sm:$0xff]
    %v141 = vld [vmem:[#allocation2 + $0x22c] sm:$0xf]
    %v142 = vld [vmem:[#allocation2 + $0x230] sm:$0xff]
    %v143 = vld [vmem:[#allocation2 + $0x238] sm:$0xff]
    %v144 = vld [vmem:[#allocation2 + $0x240] sm:$0xf]
    %v145 = vld [vmem:[#allocation2 + $0x244] sm:$0xff]
    %v146 = vld [vmem:[#allocation2 + $0x24c] sm:$0xff]
    %v147 = vld [vmem:[#allocation2 + $0x254] sm:$0xf]
    %v148 = vld [vmem:[#allocation2 + $0x258] sm:$0xff]
    %v149 = vld [vmem:[#allocation2 + $0x260] sm:$0xff]
    %v150 = vld [vmem:[#allocation2 + $0x268] sm:$0xf]
    %v151 = vld [vmem:[#allocation2 + $0x26c] sm:$0xff]
    %v152 = vld [vmem:[#allocation2 + $0x274] sm:$0xff]
    %v153 = vld [vmem:[#allocation2 + $0x27c] sm:$0xf]
    %v154 = vld [vmem:[#allocation2 + $0x280] sm:$0xff]
    %v155 = vld [vmem:[#allocation2 + $0x288] sm:$0xff]
    %v156 = vld [vmem:[#allocation2 + $0x290] sm:$0xf]
    %v157 = vld [vmem:[#allocation2 + $0x294] sm:$0xff]
    %v158 = vld [vmem:[#allocation2 + $0x29c] sm:$0xff]
    %v159 = vld [vmem:[#allocation2 + $0x2a4] sm:$0xf]
    %v160 = vld [vmem:[#allocation2 + $0x2a8] sm:$0xff]
    %v161 = vld [vmem:[#allocation2 + $0x2b0] sm:$0xff]
    %v162 = vld [vmem:[#allocation2 + $0x2b8] sm:$0xf]
    %v163 = vld [vmem:[#allocation2 + $0x2bc] sm:$0xff]
    %v164 = vld [vmem:[#allocation2 + $0x2c4] sm:$0xff]
    %v165 = vld [vmem:[#allocation2 + $0x2cc] sm:$0xf]
    %v166 = vld [vmem:[#allocation2 + $0x2d0] sm:$0xff]
    %v167 = vld [vmem:[#allocation2 + $0x2d8] sm:$0xff]
    %v168 = vld [vmem:[#allocation2 + $0x2e0] sm:$0xf]
    %v169 = vld [vmem:[#allocation2 + $0x2e4] sm:$0xff]
    %v170 = vld [vmem:[#allocation2 + $0x2ec] sm:$0xff]
    %v171 = vld [vmem:[#allocation2 + $0x2f4] sm:$0xf]
    %v172 = vld [vmem:[#allocation2 + $0x2f8] sm:$0xff]
    %v173 = vld [vmem:[#allocation2 + $0x300] sm:$0xff]
    %v174 = vld [vmem:[#allocation2 + $0x308] sm:$0xf]
    %v175 = vld [vmem:[#allocation2 + $0x30c] sm:$0xff]
    %v176 = vld [vmem:[#allocation2 + $0x314] sm:$0xff]
    %v177 = vld [vmem:[#allocation2 + $0x31c] sm:$0xf]
    %v178 = vld [vmem:[#allocation2 + $0x320] sm:$0xff]
    %v179 = vld [vmem:[#allocation2 + $0x328] sm:$0xff]
    %v180 = vld [vmem:[#allocation2 + $0x330] sm:$0xf]
    %v181 = vld [vmem:[#allocation2 + $0x334] sm:$0xff]
    %v182 = vld [vmem:[#allocation2 + $0x33c] sm:$0xff]
    %v183 = vld [vmem:[#allocation2 + $0x344] sm:$0xf]
    %v184 = vld [vmem:[#allocation2 + $0x348] sm:$0xff]
    %v185 = vld [vmem:[#allocation2 + $0x350] sm:$0xff]
    %v186 = vld [vmem:[#allocation2 + $0x358] sm:$0xf]
    %v187 = vld [vmem:[#allocation2 + $0x35c] sm:$0xff]
    %v188 = vld [vmem:[#allocation2 + $0x364] sm:$0xff]
    %v189 = vld [vmem:[#allocation2 + $0x36c] sm:$0xf]
    %v190 = vld [vmem:[#allocation2 + $0x370] sm:$0xff]
    %v191 = vld [vmem:[#allocation2 + $0x378] sm:$0xff]
    %v192 = vld [vmem:[#allocation2 + $0x380] sm:$0xf]
    %v193 = vld [vmem:[#allocation2 + $0x384] sm:$0xff]
    %v194 = vld [vmem:[#allocation2 + $0x38c] sm:$0xff]
    %v195 = vld [vmem:[#allocation2 + $0x394] sm:$0xf]
    %v196 = vld [vmem:[#allocation2 + $0x398] sm:$0xff]
    %v197 = vld [vmem:[#allocation2 + $0x3a0] sm:$0xff]
    %v198 = vld [vmem:[#allocation2 + $0x3a8] sm:$0xf]
    %v199 = vld [vmem:[#allocation2 + $0x3ac] sm:$0xff]
    %v200 = vld [vmem:[#allocation2 + $0x3b4] sm:$0xff]
    %v201 = vld [vmem:[#allocation2 + $0x3bc] sm:$0xf]
    %v202 = vld [vmem:[#allocation2 + $0x3c0] sm:$0xff]
    %v203 = vld [vmem:[#allocation2 + $0x3c8] sm:$0xff]
    %v204 = vld [vmem:[#allocation2 + $0x3d0] sm:$0xf]
    %v205 = vld [vmem:[#allocation2 + $0x3d4] sm:$0xff]
    %v206 = vld [vmem:[#allocation2 + $0x3dc] sm:$0xff]
    %v207 = vld [vmem:[#allocation2 + $0x3e4] sm:$0xf]
    %v208 = vld [vmem:[#allocation2 + $0x3e8] sm:$0xff]
    %v209 = vld [vmem:[#allocation2 + $0x3f0] sm:$0xff]
    %v210 = vld [vmem:[#allocation2 + $0x3f8] sm:$0xf]
    %v211 = vld [vmem:[#allocation2 + $0x3fc] sm:$0xff]
    %v212 = vld [vmem:[#allocation2 + $0x404] sm:$0xff]
    %v213 = vld [vmem:[#allocation2 + $0x40c] sm:$0xf]
    %v214 = vld [vmem:[#allocation2 + $0x410] sm:$0xff]
    %v215 = vld [vmem:[#allocation2 + $0x418] sm:$0xff]
    %v216 = vld [vmem:[#allocation2 + $0x420] sm:$0xf]
    %v217 = vld [vmem:[#allocation2 + $0x424] sm:$0xff]
    %v218 = vld [vmem:[#allocation2 + $0x42c] sm:$0xff]
    %v219 = vld [vmem:[#allocation2 + $0x434] sm:$0xf]
    %v220 = vld [vmem:[#allocation2 + $0x438] sm:$0xff]
    %v221 = vld [vmem:[#allocation2 + $0x440] sm:$0xff]
    %v222 = vld [vmem:[#allocation2 + $0x448] sm:$0xf]
    %v223 = vld [vmem:[#allocation2 + $0x44c] sm:$0xff]
    %v224 = vld [vmem:[#allocation2 + $0x454] sm:$0xff]
    %v225 = vld [vmem:[#allocation2 + $0x45c] sm:$0xf]
    %v226 = vld [vmem:[#allocation2 + $0x460] sm:$0xff]
    %v227 = vld [vmem:[#allocation2 + $0x468] sm:$0xff]
    %v228 = vld [vmem:[#allocation2 + $0x470] sm:$0xf]
    %v229 = vld [vmem:[#allocation2 + $0x474] sm:$0xff]
    %v230 = vld [vmem:[#allocation2 + $0x47c] sm:$0xff]
    %v231 = vld [vmem:[#allocation2 + $0x484] sm:$0xf]
    %v232 = vld [vmem:[#allocation2 + $0x488] sm:$0xff]
    %v233 = vld [vmem:[#allocation2 + $0x490] sm:$0xff]
    %v234 = vld [vmem:[#allocation2 + $0x498] sm:$0xf]
    %v235 = vld [vmem:[#allocation2 + $0x49c] sm:$0xff]
    %v236 = vld [vmem:[#allocation2 + $0x4a4] sm:$0xff]
    %v237 = vld [vmem:[#allocation2 + $0x4ac] sm:$0xf]
    %v238 = vld [vmem:[#allocation2 + $0x4b0] sm:$0xff]
    %v239 = vld [vmem:[#allocation2 + $0x4b8] sm:$0xff]
    %v240 = vld [vmem:[#allocation2 + $0x4c0] sm:$0xf]
    %v241 = vld [vmem:[#allocation2 + $0x4c4] sm:$0xff]
    %v242 = vld [vmem:[#allocation2 + $0x4cc] sm:$0xff]
    %v243 = vld [vmem:[#allocation2 + $0x4d4] sm:$0xf]
    %v244 = vld [vmem:[#allocation2 + $0x4d8] sm:$0xff]
    %v245 = vld [vmem:[#allocation2 + $0x4e0] sm:$0xff]
    %v246 = vld [vmem:[#allocation2 + $0x4e8] sm:$0xf]
    %v247 = vld [vmem:[#allocation2 + $0x4ec] sm:$0xff]
    %v248 = vld [vmem:[#allocation2 + $0x4f4] sm:$0xff]
    %v249 = vld [vmem:[#allocation2 + $0x4fc] sm:$0xf]
    %v250 = vld [vmem:[#allocation2 + $0x500] sm:$0xff]
    %v251 = vld [vmem:[#allocation2 + $0x508] sm:$0xff]
    %v252 = vld [vmem:[#allocation2 + $0x510] sm:$0xf]
    %v253 = vld [vmem:[#allocation2 + $0x514] sm:$0xff]
    %v254 = vld [vmem:[#allocation2 + $0x51c] sm:$0xff]
    %v255 = vld [vmem:[#allocation2 + $0x524] sm:$0xf]
    %v256 = vld [vmem:[#allocation2 + $0x528] sm:$0xff]
    %v257 = vld [vmem:[#allocation2 + $0x530] sm:$0xff]
    %v258 = vld [vmem:[#allocation2 + $0x538] sm:$0xf]
    %v259 = vld [vmem:[#allocation2 + $0x53c] sm:$0xff]
    %v260 = vld [vmem:[#allocation2 + $0x544] sm:$0xff]
    %v261 = vld [vmem:[#allocation2 + $0x54c] sm:$0xf]
    %v262 = vld [vmem:[#allocation2 + $0x550] sm:$0xff]
    %v263 = vld [vmem:[#allocation2 + $0x558] sm:$0xff]
    %v264 = vld [vmem:[#allocation2 + $0x560] sm:$0xf]
    %v265 = vld [vmem:[#allocation2 + $0x564] sm:$0xff]
    %v266 = vld [vmem:[#allocation2 + $0x56c] sm:$0xff]
    %v267 = vld [vmem:[#allocation2 + $0x574] sm:$0xf]
    %v268 = vld [vmem:[#allocation2 + $0x578] sm:$0xff]
    %v269 = vld [vmem:[#allocation2 + $0x580] sm:$0xff]
    %v270 = vld [vmem:[#allocation2 + $0x588] sm:$0xf]
    %v271 = vld [vmem:[#allocation2 + $0x58c] sm:$0xff]
    %v272 = vld [vmem:[#allocation2 + $0x594] sm:$0xff]
    %v273 = vld [vmem:[#allocation2 + $0x59c] sm:$0xf]
    %v274 = vld [vmem:[#allocation2 + $0x5a0] sm:$0xff]
    %v275 = vld [vmem:[#allocation2 + $0x5a8] sm:$0xff]
    %v276 = vld [vmem:[#allocation2 + $0x5b0] sm:$0xf]
    %v277 = vld [vmem:[#allocation2 + $0x5b4] sm:$0xff]
    %v278 = vld [vmem:[#allocation2 + $0x5bc] sm:$0xff]
    %v279 = vld [vmem:[#allocation2 + $0x5c4] sm:$0xf]
    %v280 = vld [vmem:[#allocation2 + $0x5c8] sm:$0xff]
    %v281 = vld [vmem:[#allocation2 + $0x5d0] sm:$0xff]
    %v282 = vld [vmem:[#allocation2 + $0x5d8] sm:$0xf]
    %v283 = vld [vmem:[#allocation2 + $0x5dc] sm:$0xff]
    %v284 = vld [vmem:[#allocation2 + $0x5e4] sm:$0xff]
    %v285 = vld [vmem:[#allocation2 + $0x5ec] sm:$0xf]
    %v286 = vld [vmem:[#allocation2 + $0x5f0] sm:$0xff]
    %v287 = vld [vmem:[#allocation2 + $0x5f8] sm:$0xff]
    %v288 = vld [vmem:[#allocation2 + $0x600] sm:$0xf]
    %v289 = vld [vmem:[#allocation2 + $0x604] sm:$0xff]
    %v290 = vld [vmem:[#allocation2 + $0x60c] sm:$0xff]
    %v291 = vld [vmem:[#allocation2 + $0x614] sm:$0xf]
    %v292 = vld [vmem:[#allocation2 + $0x618] sm:$0xff]
    %v293 = vld [vmem:[#allocation2 + $0x620] sm:$0xff]
    %v294 = vld [vmem:[#allocation2 + $0x628] sm:$0xf]
    %v295 = vld [vmem:[#allocation2 + $0x62c] sm:$0xff]
    %v296 = vld [vmem:[#allocation2 + $0x634] sm:$0xff]
    %v297 = vld [vmem:[#allocation2 + $0x63c] sm:$0xf]
    %v298 = vld [vmem:[#allocation2 + $0x640] sm:$0xff]
    %v299 = vld [vmem:[#allocation2 + $0x648] sm:$0xff]
    %v300 = vld [vmem:[#allocation2 + $0x650] sm:$0xf]
    %v301 = vld [vmem:[#allocation2 + $0x654] sm:$0xff]
    %v302 = vld [vmem:[#allocation2 + $0x65c] sm:$0xff]
    %v303 = vld [vmem:[#allocation2 + $0x664] sm:$0xf]
    %v304 = vld [vmem:[#allocation2 + $0x668] sm:$0xff]
    %v305 = vld [vmem:[#allocation2 + $0x670] sm:$0xff]
    %v306 = vld [vmem:[#allocation2 + $0x678] sm:$0xf]
    %v307 = vld [vmem:[#allocation2 + $0x67c] sm:$0xff]
    %v308 = vld [vmem:[#allocation2 + $0x684] sm:$0xff]
    %v309 = vld [vmem:[#allocation2 + $0x68c] sm:$0xf]
    %v310 = vld [vmem:[#allocation2 + $0x690] sm:$0xff]
    %v311 = vld [vmem:[#allocation2 + $0x698] sm:$0xff]
    %v312 = vld [vmem:[#allocation2 + $0x6a0] sm:$0xf]
    %v313 = vld [vmem:[#allocation2 + $0x6a4] sm:$0xff]
    %v314 = vld [vmem:[#allocation2 + $0x6ac] sm:$0xff]
    %v315 = vld [vmem:[#allocation2 + $0x6b4] sm:$0xf]
    %v316 = vld [vmem:[#allocation2 + $0x6b8] sm:$0xff]
    %v317 = vld [vmem:[#allocation2 + $0x6c0] sm:$0xff]
    %v318 = vld [vmem:[#allocation2 + $0x6c8] sm:$0xf]
    %v319 = vld [vmem:[#allocation2 + $0x6cc] sm:$0xff]
    %v320 = vld [vmem:[#allocation2 + $0x6d4] sm:$0xff]
    %v321 = vld [vmem:[#allocation2 + $0x6dc] sm:$0xf]
    %v322 = vld [vmem:[#allocation2 + $0x6e0] sm:$0xff]
    %v323 = vld [vmem:[#allocation2 + $0x6e8] sm:$0xff]
    %v324 = vld [vmem:[#allocation2 + $0x6f0] sm:$0xf]
    %v325 = vld [vmem:[#allocation2 + $0x6f4] sm:$0xff]
    %v326 = vld [vmem:[#allocation2 + $0x6fc] sm:$0xff]
    %v327 = vld [vmem:[#allocation2 + $0x704] sm:$0xf]
    %v328 = vld [vmem:[#allocation2 + $0x708] sm:$0xff]
    %v329 = vld [vmem:[#allocation2 + $0x710] sm:$0xff]
    %v330 = vld [vmem:[#allocation2 + $0x718] sm:$0xf]
    %v331 = vld [vmem:[#allocation2 + $0x71c] sm:$0xff]
    %v332 = vld [vmem:[#allocation2 + $0x724] sm:$0xff]
    %v333 = vld [vmem:[#allocation2 + $0x72c] sm:$0xf]
    %v334 = vld [vmem:[#allocation2 + $0x730] sm:$0xff]
    %v335 = vld [vmem:[#allocation2 + $0x738] sm:$0xff]
    %v336 = vld [vmem:[#allocation2 + $0x740] sm:$0xf]
    %v337 = vld [vmem:[#allocation2 + $0x744] sm:$0xff]
    %v338 = vld [vmem:[#allocation2 + $0x74c] sm:$0xff]
    %v339 = vld [vmem:[#allocation2 + $0x754] sm:$0xf]
    %v340 = vld [vmem:[#allocation2 + $0x758] sm:$0xff]
    %v341 = vld [vmem:[#allocation2 + $0x760] sm:$0xff]
    %v342 = vld [vmem:[#allocation2 + $0x768] sm:$0xf]
    %v343 = vld [vmem:[#allocation2 + $0x76c] sm:$0xff]
    %v344 = vld [vmem:[#allocation2 + $0x774] sm:$0xff]
    %v345 = vld [vmem:[#allocation2 + $0x77c] sm:$0xf]
    %v346 = vld [vmem:[%s2] sm:$0x1f]
    %v348 = vlaneseq
    %v349 = vshrl.u32 %v348, 7
    %v350 = vsub.s32 0, %v349
    %v351 = vrot.slane %v346, %v350
    %v352 = vlaneseq
    %v353 = vshrl.u32 %v352, 7
    %v354 = vsub.s32 1, %v353
    %v355 = vrot.slane %v346, %v354
    %v356 = vlaneseq
    %v357 = vshrl.u32 %v356, 7
    %v358 = vsub.s32 2, %v357
    %v359 = vrot.slane %v346, %v358
    %v360 = vlaneseq
    %v361 = vshrl.u32 %v360, 7
    %v362 = vsub.s32 3, %v361
    %v363 = vrot.slane %v346, %v362
    %v364 = vlaneseq
    %v365 = vshrl.u32 %v364, 7
    %v366 = vsub.s32 4, %v365
    %v367 = vrot.slane %v346, %v366
    %v376 = vunpack.c.l.b16 %v55
    %v377 = vunpack.c.h.b16 %v55
    %v378 = vunpack.c.l.b16 %v56
    %v379 = vunpack.c.h.b16 %v56
    %v380 = vunpack.c.l.b16 %v57
    %v381 = vunpack.c.h.b16 %v57
    %v382 = vpack.c.b16 %v376, %v376
    %v383 = vpack.c.b16 %v377, %v377
    %v384 = vpack.c.b16 %v378, %v378
    %v385 = vpack.c.b16 %v379, %v379
    %v386 = vpack.c.b16 %v380, %v380
    %v387 = vpack.c.b16 %v381, %v381
    %v682 = vunpack.c.l.b16 %v58
    %v683 = vunpack.c.h.b16 %v58
    %v684 = vunpack.c.l.b16 %v59
    %v685 = vunpack.c.h.b16 %v59
    %v686 = vunpack.c.l.b16 %v60
    %v687 = vunpack.c.l.b16 %v61
    %v688 = vunpack.c.h.b16 %v61
    %v689 = vunpack.c.l.b16 %v62
    %v690 = vunpack.c.h.b16 %v62
    %v691 = vunpack.c.l.b16 %v63
    %v692 = vunpack.c.l.b16 %v64
    %v693 = vunpack.c.h.b16 %v64
    %v694 = vunpack.c.l.b16 %v65
    %v695 = vunpack.c.h.b16 %v65
    %v696 = vunpack.c.l.b16 %v66
    %v697 = vunpack.c.l.b16 %v67
    %v698 = vunpack.c.h.b16 %v67
    %v699 = vunpack.c.l.b16 %v68
    %v700 = vunpack.c.h.b16 %v68
    %v701 = vunpack.c.l.b16 %v69
    %v702 = vunpack.c.l.b16 %v70
    %v703 = vunpack.c.h.b16 %v70
    %v704 = vunpack.c.l.b16 %v71
    %v705 = vunpack.c.h.b16 %v71
    %v706 = vunpack.c.l.b16 %v72
    %v707 = vunpack.c.l.b16 %v73
    %v708 = vunpack.c.h.b16 %v73
    %v709 = vunpack.c.l.b16 %v74
    %v710 = vunpack.c.h.b16 %v74
    %v711 = vunpack.c.l.b16 %v75
    %v712 = vunpack.c.l.b16 %v76
    %v713 = vunpack.c.h.b16 %v76
    %v714 = vunpack.c.l.b16 %v77
    %v715 = vunpack.c.h.b16 %v77
    %v716 = vunpack.c.l.b16 %v78
    %v717 = vunpack.c.l.b16 %v79
    %v718 = vunpack.c.h.b16 %v79
    %v719 = vunpack.c.l.b16 %v80
    %v720 = vunpack.c.h.b16 %v80
    %v721 = vunpack.c.l.b16 %v81
    %v722 = vunpack.c.l.b16 %v82
    %v723 = vunpack.c.h.b16 %v82
    %v724 = vunpack.c.l.b16 %v83
    %v725 = vunpack.c.h.b16 %v83
    %v726 = vunpack.c.l.b16 %v84
    %v727 = vunpack.c.l.b16 %v85
    %v728 = vunpack.c.h.b16 %v85
    %v729 = vunpack.c.l.b16 %v86
    %v730 = vunpack.c.h.b16 %v86
    %v731 = vunpack.c.l.b16 %v87
    %v732 = vunpack.c.l.b16 %v88
    %v733 = vunpack.c.h.b16 %v88
    %v734 = vunpack.c.l.b16 %v89
    %v735 = vunpack.c.h.b16 %v89
    %v736 = vunpack.c.l.b16 %v90
    %v737 = vunpack.c.l.b16 %v91
    %v738 = vunpack.c.h.b16 %v91
    %v739 = vunpack.c.l.b16 %v92
    %v740 = vunpack.c.h.b16 %v92
    %v741 = vunpack.c.l.b16 %v93
    %v742 = vunpack.c.l.b16 %v94
    %v743 = vunpack.c.h.b16 %v94
    %v744 = vunpack.c.l.b16 %v95
    %v745 = vunpack.c.h.b16 %v95
    %v746 = vunpack.c.l.b16 %v96
    %v747 = vunpack.c.l.b16 %v97
    %v748 = vunpack.c.h.b16 %v97
    %v749 = vunpack.c.l.b16 %v98
    %v750 = vunpack.c.h.b16 %v98
    %v751 = vunpack.c.l.b16 %v99
    %v752 = vunpack.c.l.b16 %v100
    %v753 = vunpack.c.h.b16 %v100
    %v754 = vunpack.c.l.b16 %v101
    %v755 = vunpack.c.h.b16 %v101
    %v756 = vunpack.c.l.b16 %v102
    %v757 = vunpack.c.l.b16 %v103
    %v758 = vunpack.c.h.b16 %v103
    %v759 = vunpack.c.l.b16 %v104
    %v760 = vunpack.c.h.b16 %v104
    %v761 = vunpack.c.l.b16 %v105
    %v762 = vunpack.c.l.b16 %v106
    %v763 = vunpack.c.h.b16 %v106
    %v764 = vunpack.c.l.b16 %v107
    %v765 = vunpack.c.h.b16 %v107
    %v766 = vunpack.c.l.b16 %v108
    %v767 = vunpack.c.l.b16 %v109
    %v768 = vunpack.c.h.b16 %v109
    %v769 = vunpack.c.l.b16 %v110
    %v770 = vunpack.c.h.b16 %v110
    %v771 = vunpack.c.l.b16 %v111
    %v772 = vunpack.c.l.b16 %v112
    %v773 = vunpack.c.h.b16 %v112
    %v774 = vunpack.c.l.b16 %v113
    %v775 = vunpack.c.h.b16 %v113
    %v776 = vunpack.c.l.b16 %v114
    %v777 = vunpack.c.l.b16 %v115
    %v778 = vunpack.c.h.b16 %v115
    %v779 = vunpack.c.l.b16 %v116
    %v780 = vunpack.c.h.b16 %v116
    %v781 = vunpack.c.l.b16 %v117
    %v782 = vunpack.c.l.b16 %v118
    %v783 = vunpack.c.h.b16 %v118
    %v784 = vunpack.c.l.b16 %v119
    %v785 = vunpack.c.h.b16 %v119
    %v786 = vunpack.c.l.b16 %v120
    %v787 = vunpack.c.l.b16 %v121
    %v788 = vunpack.c.h.b16 %v121
    %v789 = vunpack.c.l.b16 %v122
    %v790 = vunpack.c.h.b16 %v122
    %v791 = vunpack.c.l.b16 %v123
    %v792 = vunpack.c.l.b16 %v124
    %v793 = vunpack.c.h.b16 %v124
    %v794 = vunpack.c.l.b16 %v125
    %v795 = vunpack.c.h.b16 %v125
    %v796 = vunpack.c.l.b16 %v126
    %v797 = vunpack.c.l.b16 %v127
    %v798 = vunpack.c.h.b16 %v127
    %v799 = vunpack.c.l.b16 %v128
    %v800 = vunpack.c.h.b16 %v128
    %v801 = vunpack.c.l.b16 %v129
    %v802 = vunpack.c.l.b16 %v130
    %v803 = vunpack.c.h.b16 %v130
    %v804 = vunpack.c.l.b16 %v131
    %v805 = vunpack.c.h.b16 %v131
    %v806 = vunpack.c.l.b16 %v132
    %v807 = vunpack.c.l.b16 %v133
    %v808 = vunpack.c.h.b16 %v133
    %v809 = vunpack.c.l.b16 %v134
    %v810 = vunpack.c.h.b16 %v134
    %v811 = vunpack.c.l.b16 %v135
    %v812 = vunpack.c.l.b16 %v136
    %v813 = vunpack.c.h.b16 %v136
    %v814 = vunpack.c.l.b16 %v137
    %v815 = vunpack.c.h.b16 %v137
    %v816 = vunpack.c.l.b16 %v138
    %v817 = vunpack.c.l.b16 %v139
    %v818 = vunpack.c.h.b16 %v139
    %v819 = vunpack.c.l.b16 %v140
    %v820 = vunpack.c.h.b16 %v140
    %v821 = vunpack.c.l.b16 %v141
    %v822 = vunpack.c.l.b16 %v142
    %v823 = vunpack.c.h.b16 %v142
    %v824 = vunpack.c.l.b16 %v143
    %v825 = vunpack.c.h.b16 %v143
    %v826 = vunpack.c.l.b16 %v144
    %v827 = vunpack.c.l.b16 %v145
    %v828 = vunpack.c.h.b16 %v145
    %v829 = vunpack.c.l.b16 %v146
    %v830 = vunpack.c.h.b16 %v146
    %v831 = vunpack.c.l.b16 %v147
    %v832 = vunpack.c.l.b16 %v148
    %v833 = vunpack.c.h.b16 %v148
    %v834 = vunpack.c.l.b16 %v149
    %v835 = vunpack.c.h.b16 %v149
    %v836 = vunpack.c.l.b16 %v150
    %v837 = vunpack.c.l.b16 %v151
    %v838 = vunpack.c.h.b16 %v151
    %v839 = vunpack.c.l.b16 %v152
    %v840 = vunpack.c.h.b16 %v152
    %v841 = vunpack.c.l.b16 %v153
    %v842 = vunpack.c.l.b16 %v154
    %v843 = vunpack.c.h.b16 %v154
    %v844 = vunpack.c.l.b16 %v155
    %v845 = vunpack.c.h.b16 %v155
    %v846 = vunpack.c.l.b16 %v156
    %v847 = vunpack.c.l.b16 %v157
    %v848 = vunpack.c.h.b16 %v157
    %v849 = vunpack.c.l.b16 %v158
    %v850 = vunpack.c.h.b16 %v158
    %v851 = vunpack.c.l.b16 %v159
    %v852 = vunpack.c.l.b16 %v160
    %v853 = vunpack.c.h.b16 %v160
    %v854 = vunpack.c.l.b16 %v161
    %v855 = vunpack.c.h.b16 %v161
    %v856 = vunpack.c.l.b16 %v162
    %v857 = vunpack.c.l.b16 %v163
    %v858 = vunpack.c.h.b16 %v163
    %v859 = vunpack.c.l.b16 %v164
    %v860 = vunpack.c.h.b16 %v164
    %v861 = vunpack.c.l.b16 %v165
    %v862 = vunpack.c.l.b16 %v166
    %v863 = vunpack.c.h.b16 %v166
    %v864 = vunpack.c.l.b16 %v167
    %v865 = vunpack.c.h.b16 %v167
    %v866 = vunpack.c.l.b16 %v168
    %v867 = vunpack.c.l.b16 %v169
    %v868 = vunpack.c.h.b16 %v169
    %v869 = vunpack.c.l.b16 %v170
    %v870 = vunpack.c.h.b16 %v170
    %v871 = vunpack.c.l.b16 %v171
    %v872 = vunpack.c.l.b16 %v172
    %v873 = vunpack.c.h.b16 %v172
    %v874 = vunpack.c.l.b16 %v173
    %v875 = vunpack.c.h.b16 %v173
    %v876 = vunpack.c.l.b16 %v174
    %v877 = vunpack.c.l.b16 %v175
    %v878 = vunpack.c.h.b16 %v175
    %v879 = vunpack.c.l.b16 %v176
    %v880 = vunpack.c.h.b16 %v176
    %v881 = vunpack.c.l.b16 %v177
    %v882 = vunpack.c.l.b16 %v178
    %v883 = vunpack.c.h.b16 %v178
    %v884 = vunpack.c.l.b16 %v179
    %v885 = vunpack.c.h.b16 %v179
    %v886 = vunpack.c.l.b16 %v180
    %v887 = vunpack.c.l.b16 %v181
    %v888 = vunpack.c.h.b16 %v181
    %v889 = vunpack.c.l.b16 %v182
    %v890 = vunpack.c.h.b16 %v182
    %v891 = vunpack.c.l.b16 %v183
    %v892 = vunpack.c.l.b16 %v184
    %v893 = vunpack.c.h.b16 %v184
    %v894 = vunpack.c.l.b16 %v185
    %v895 = vunpack.c.h.b16 %v185
    %v896 = vunpack.c.l.b16 %v186
    %v897 = vunpack.c.l.b16 %v187
    %v898 = vunpack.c.h.b16 %v187
    %v899 = vunpack.c.l.b16 %v188
    %v900 = vunpack.c.h.b16 %v188
    %v901 = vunpack.c.l.b16 %v189
    %v902 = vunpack.c.l.b16 %v190
    %v903 = vunpack.c.h.b16 %v190
    %v904 = vunpack.c.l.b16 %v191
    %v905 = vunpack.c.h.b16 %v191
    %v906 = vunpack.c.l.b16 %v192
    %v907 = vunpack.c.l.b16 %v193
    %v908 = vunpack.c.h.b16 %v193
    %v909 = vunpack.c.l.b16 %v194
    %v910 = vunpack.c.h.b16 %v194
    %v911 = vunpack.c.l.b16 %v195
    %v912 = vunpack.c.l.b16 %v196
    %v913 = vunpack.c.h.b16 %v196
    %v914 = vunpack.c.l.b16 %v197
    %v915 = vunpack.c.h.b16 %v197
    %v916 = vunpack.c.l.b16 %v198
    %v917 = vunpack.c.l.b16 %v199
    %v918 = vunpack.c.h.b16 %v199
    %v919 = vunpack.c.l.b16 %v200
    %v920 = vunpack.c.h.b16 %v200
    %v921 = vunpack.c.l.b16 %v201
    %v922 = vunpack.c.l.b16 %v202
    %v923 = vunpack.c.h.b16 %v202
    %v924 = vunpack.c.l.b16 %v203
    %v925 = vunpack.c.h.b16 %v203
    %v926 = vunpack.c.l.b16 %v204
    %v927 = vunpack.c.l.b16 %v205
    %v928 = vunpack.c.h.b16 %v205
    %v929 = vunpack.c.l.b16 %v206
    %v930 = vunpack.c.h.b16 %v206
    %v931 = vunpack.c.l.b16 %v207
    %v932 = vunpack.c.l.b16 %v208
    %v933 = vunpack.c.h.b16 %v208
    %v934 = vunpack.c.l.b16 %v209
    %v935 = vunpack.c.h.b16 %v209
    %v936 = vunpack.c.l.b16 %v210
    %v937 = vunpack.c.l.b16 %v211
    %v938 = vunpack.c.h.b16 %v211
    %v939 = vunpack.c.l.b16 %v212
    %v940 = vunpack.c.h.b16 %v212
    %v941 = vunpack.c.l.b16 %v213
    %v942 = vunpack.c.l.b16 %v214
    %v943 = vunpack.c.h.b16 %v214
    %v944 = vunpack.c.l.b16 %v215
    %v945 = vunpack.c.h.b16 %v215
    %v946 = vunpack.c.l.b16 %v216
    %v947 = vunpack.c.l.b16 %v217
    %v948 = vunpack.c.h.b16 %v217
    %v949 = vunpack.c.l.b16 %v218
    %v950 = vunpack.c.h.b16 %v218
    %v951 = vunpack.c.l.b16 %v219
    %v952 = vunpack.c.l.b16 %v220
    %v953 = vunpack.c.h.b16 %v220
    %v954 = vunpack.c.l.b16 %v221
    %v955 = vunpack.c.h.b16 %v221
    %v956 = vunpack.c.l.b16 %v222
    %v957 = vunpack.c.l.b16 %v223
    %v958 = vunpack.c.h.b16 %v223
    %v959 = vunpack.c.l.b16 %v224
    %v960 = vunpack.c.h.b16 %v224
    %v961 = vunpack.c.l.b16 %v225
    %v962 = vunpack.c.l.b16 %v226
    %v963 = vunpack.c.h.b16 %v226
    %v964 = vunpack.c.l.b16 %v227
    %v965 = vunpack.c.h.b16 %v227
    %v966 = vunpack.c.l.b16 %v228
    %v967 = vunpack.c.l.b16 %v229
    %v968 = vunpack.c.h.b16 %v229
    %v969 = vunpack.c.l.b16 %v230
    %v970 = vunpack.c.h.b16 %v230
    %v971 = vunpack.c.l.b16 %v231
    %v972 = vunpack.c.l.b16 %v232
    %v973 = vunpack.c.h.b16 %v232
    %v974 = vunpack.c.l.b16 %v233
    %v975 = vunpack.c.h.b16 %v233
    %v976 = vunpack.c.l.b16 %v234
    %v977 = vunpack.c.l.b16 %v235
    %v978 = vunpack.c.h.b16 %v235
    %v979 = vunpack.c.l.b16 %v236
    %v980 = vunpack.c.h.b16 %v236
    %v981 = vunpack.c.l.b16 %v237
    %v982 = vunpack.c.l.b16 %v238
    %v983 = vunpack.c.h.b16 %v238
    %v984 = vunpack.c.l.b16 %v239
    %v985 = vunpack.c.h.b16 %v239
    %v986 = vunpack.c.l.b16 %v240
    %v987 = vunpack.c.l.b16 %v241
    %v988 = vunpack.c.h.b16 %v241
    %v989 = vunpack.c.l.b16 %v242
    %v990 = vunpack.c.h.b16 %v242
    %v991 = vunpack.c.l.b16 %v243
    %v992 = vunpack.c.l.b16 %v244
    %v993 = vunpack.c.h.b16 %v244
    %v994 = vunpack.c.l.b16 %v245
    %v995 = vunpack.c.h.b16 %v245
    %v996 = vunpack.c.l.b16 %v246
    %v997 = vunpack.c.l.b16 %v247
    %v998 = vunpack.c.h.b16 %v247
    %v999 = vunpack.c.l.b16 %v248
    %v1000 = vunpack.c.h.b16 %v248
    %v1001 = vunpack.c.l.b16 %v249
    %v1002 = vunpack.c.l.b16 %v250
    %v1003 = vunpack.c.h.b16 %v250
    %v1004 = vunpack.c.l.b16 %v251
    %v1005 = vunpack.c.h.b16 %v251
    %v1006 = vunpack.c.l.b16 %v252
    %v1007 = vunpack.c.l.b16 %v253
    %v1008 = vunpack.c.h.b16 %v253
    %v1009 = vunpack.c.l.b16 %v254
    %v1010 = vunpack.c.h.b16 %v254
    %v1011 = vunpack.c.l.b16 %v255
    %v1012 = vunpack.c.l.b16 %v256
    %v1013 = vunpack.c.h.b16 %v256
    %v1014 = vunpack.c.l.b16 %v257
    %v1015 = vunpack.c.h.b16 %v257
    %v1016 = vunpack.c.l.b16 %v258
    %v1017 = vunpack.c.l.b16 %v259
    %v1018 = vunpack.c.h.b16 %v259
    %v1019 = vunpack.c.l.b16 %v260
    %v1020 = vunpack.c.h.b16 %v260
    %v1021 = vunpack.c.l.b16 %v261
    %v1022 = vunpack.c.l.b16 %v262
    %v1023 = vunpack.c.h.b16 %v262
    %v1024 = vunpack.c.l.b16 %v263
    %v1025 = vunpack.c.h.b16 %v263
    %v1026 = vunpack.c.l.b16 %v264
    %v1027 = vunpack.c.l.b16 %v265
    %v1028 = vunpack.c.h.b16 %v265
    %v1029 = vunpack.c.l.b16 %v266
    %v1030 = vunpack.c.h.b16 %v266
    %v1031 = vunpack.c.l.b16 %v267
    %v1032 = vunpack.c.l.b16 %v268
    %v1033 = vunpack.c.h.b16 %v268
    %v1034 = vunpack.c.l.b16 %v269
    %v1035 = vunpack.c.h.b16 %v269
    %v1036 = vunpack.c.l.b16 %v270
    %v1037 = vunpack.c.l.b16 %v271
    %v1038 = vunpack.c.h.b16 %v271
    %v1039 = vunpack.c.l.b16 %v272
    %v1040 = vunpack.c.h.b16 %v272
    %v1041 = vunpack.c.l.b16 %v273
    %v1042 = vunpack.c.l.b16 %v274
    %v1043 = vunpack.c.h.b16 %v274
    %v1044 = vunpack.c.l.b16 %v275
    %v1045 = vunpack.c.h.b16 %v275
    %v1046 = vunpack.c.l.b16 %v276
    %v1047 = vunpack.c.l.b16 %v277
    %v1048 = vunpack.c.h.b16 %v277
    %v1049 = vunpack.c.l.b16 %v278
    %v1050 = vunpack.c.h.b16 %v278
    %v1051 = vunpack.c.l.b16 %v279
    %v1052 = vunpack.c.l.b16 %v280
    %v1053 = vunpack.c.h.b16 %v280
    %v1054 = vunpack.c.l.b16 %v281
    %v1055 = vunpack.c.h.b16 %v281
    %v1056 = vunpack.c.l.b16 %v282
    %v1057 = vunpack.c.l.b16 %v283
    %v1058 = vunpack.c.h.b16 %v283
    %v1059 = vunpack.c.l.b16 %v284
    %v1060 = vunpack.c.h.b16 %v284
    %v1061 = vunpack.c.l.b16 %v285
    %v1062 = vunpack.c.l.b16 %v286
    %v1063 = vunpack.c.h.b16 %v286
    %v1064 = vunpack.c.l.b16 %v287
    %v1065 = vunpack.c.h.b16 %v287
    %v1066 = vunpack.c.l.b16 %v288
    %v1067 = vunpack.c.l.b16 %v289
    %v1068 = vunpack.c.h.b16 %v289
    %v1069 = vunpack.c.l.b16 %v290
    %v1070 = vunpack.c.h.b16 %v290
    %v1071 = vunpack.c.l.b16 %v291
    %v1072 = vunpack.c.l.b16 %v292
    %v1073 = vunpack.c.h.b16 %v292
    %v1074 = vunpack.c.l.b16 %v293
    %v1075 = vunpack.c.h.b16 %v293
    %v1076 = vunpack.c.l.b16 %v294
    %v1077 = vunpack.c.l.b16 %v295
    %v1078 = vunpack.c.h.b16 %v295
    %v1079 = vunpack.c.l.b16 %v296
    %v1080 = vunpack.c.h.b16 %v296
    %v1081 = vunpack.c.l.b16 %v297
    %v1082 = vunpack.c.l.b16 %v298
    %v1083 = vunpack.c.h.b16 %v298
    %v1084 = vunpack.c.l.b16 %v299
    %v1085 = vunpack.c.h.b16 %v299
    %v1086 = vunpack.c.l.b16 %v300
    %v1087 = vunpack.c.l.b16 %v301
    %v1088 = vunpack.c.h.b16 %v301
    %v1089 = vunpack.c.l.b16 %v302
    %v1090 = vunpack.c.h.b16 %v302
    %v1091 = vunpack.c.l.b16 %v303
    %v1092 = vunpack.c.l.b16 %v304
    %v1093 = vunpack.c.h.b16 %v304
    %v1094 = vunpack.c.l.b16 %v305
    %v1095 = vunpack.c.h.b16 %v305
    %v1096 = vunpack.c.l.b16 %v306
    %v1097 = vunpack.c.l.b16 %v307
    %v1098 = vunpack.c.h.b16 %v307
    %v1099 = vunpack.c.l.b16 %v308
    %v1100 = vunpack.c.h.b16 %v308
    %v1101 = vunpack.c.l.b16 %v309
    %v1102 = vunpack.c.l.b16 %v310
    %v1103 = vunpack.c.h.b16 %v310
    %v1104 = vunpack.c.l.b16 %v311
    %v1105 = vunpack.c.h.b16 %v311
    %v1106 = vunpack.c.l.b16 %v312
    %v1107 = vunpack.c.l.b16 %v313
    %v1108 = vunpack.c.h.b16 %v313
    %v1109 = vunpack.c.l.b16 %v314
    %v1110 = vunpack.c.h.b16 %v314
    %v1111 = vunpack.c.l.b16 %v315
    %v1112 = vunpack.c.l.b16 %v316
    %v1113 = vunpack.c.h.b16 %v316
    %v1114 = vunpack.c.l.b16 %v317
    %v1115 = vunpack.c.h.b16 %v317
    %v1116 = vunpack.c.l.b16 %v318
    %v1117 = vunpack.c.l.b16 %v319
    %v1118 = vunpack.c.h.b16 %v319
    %v1119 = vunpack.c.l.b16 %v320
    %v1120 = vunpack.c.h.b16 %v320
    %v1121 = vunpack.c.l.b16 %v321
    %v1122 = vunpack.c.l.b16 %v322
    %v1123 = vunpack.c.h.b16 %v322
    %v1124 = vunpack.c.l.b16 %v323
    %v1125 = vunpack.c.h.b16 %v323
    %v1126 = vunpack.c.l.b16 %v324
    %v1127 = vunpack.c.l.b16 %v325
    %v1128 = vunpack.c.h.b16 %v325
    %v1129 = vunpack.c.l.b16 %v326
    %v1130 = vunpack.c.h.b16 %v326
    %v1131 = vunpack.c.l.b16 %v327
    %v1132 = vunpack.c.l.b16 %v328
    %v1133 = vunpack.c.h.b16 %v328
    %v1134 = vunpack.c.l.b16 %v329
    %v1135 = vunpack.c.h.b16 %v329
    %v1136 = vunpack.c.l.b16 %v330
    %v1137 = vunpack.c.l.b16 %v331
    %v1138 = vunpack.c.h.b16 %v331
    %v1139 = vunpack.c.l.b16 %v332
    %v1140 = vunpack.c.h.b16 %v332
    %v1141 = vunpack.c.l.b16 %v333
    %v1142 = vunpack.c.l.b16 %v334
    %v1143 = vunpack.c.h.b16 %v334
    %v1144 = vunpack.c.l.b16 %v335
    %v1145 = vunpack.c.h.b16 %v335
    %v1146 = vunpack.c.l.b16 %v336
    %v1147 = vunpack.c.l.b16 %v337
    %v1148 = vunpack.c.h.b16 %v337
    %v1149 = vunpack.c.l.b16 %v338
    %v1150 = vunpack.c.h.b16 %v338
    %v1151 = vunpack.c.l.b16 %v339
    %v1152 = vunpack.c.l.b16 %v340
    %v1153 = vunpack.c.h.b16 %v340
    %v1154 = vunpack.c.l.b16 %v341
    %v1155 = vunpack.c.h.b16 %v341
    %v1156 = vunpack.c.l.b16 %v342
    %v1157 = vunpack.c.l.b16 %v343
    %v1158 = vunpack.c.h.b16 %v343
    %v1159 = vunpack.c.l.b16 %v344
    %v1160 = vunpack.c.h.b16 %v344
    %v1161 = vunpack.c.l.b16 %v345
    %v1162 = vpack.c.b16 %v687, %v682
    %v1163 = vpack.c.b16 %v688, %v683
    %v1164 = vpack.c.b16 %v689, %v684
    %v1165 = vpack.c.b16 %v690, %v685
    %v1166 = vpack.c.b16 %v691, %v686
    %v1167 = vpack.c.b16 %v697, %v692
    %v1168 = vpack.c.b16 %v698, %v693
    %v1169 = vpack.c.b16 %v699, %v694
    %v1170 = vpack.c.b16 %v700, %v695
    %v1171 = vpack.c.b16 %v701, %v696
    %v1172 = vpack.c.b16 %v707, %v702
    %v1173 = vpack.c.b16 %v708, %v703
    %v1174 = vpack.c.b16 %v709, %v704
    %v1175 = vpack.c.b16 %v710, %v705
    %v1176 = vpack.c.b16 %v711, %v706
    %v1177 = vpack.c.b16 %v717, %v712
    %v1178 = vpack.c.b16 %v718, %v713
    %v1179 = vpack.c.b16 %v719, %v714
    %v1180 = vpack.c.b16 %v720, %v715
    %v1181 = vpack.c.b16 %v721, %v716
    %v1182 = vpack.c.b16 %v727, %v722
    %v1183 = vpack.c.b16 %v728, %v723
    %v1184 = vpack.c.b16 %v729, %v724
    %v1185 = vpack.c.b16 %v730, %v725
    %v1186 = vpack.c.b16 %v731, %v726
    %v1187 = vpack.c.b16 %v737, %v732
    %v1188 = vpack.c.b16 %v738, %v733
    %v1189 = vpack.c.b16 %v739, %v734
    %v1190 = vpack.c.b16 %v740, %v735
    %v1191 = vpack.c.b16 %v741, %v736
    %v1192 = vpack.c.b16 %v747, %v742
    %v1193 = vpack.c.b16 %v748, %v743
    %v1194 = vpack.c.b16 %v749, %v744
    %v1195 = vpack.c.b16 %v750, %v745
    %v1196 = vpack.c.b16 %v751, %v746
    %v1197 = vpack.c.b16 %v757, %v752
    %v1198 = vpack.c.b16 %v758, %v753
    %v1199 = vpack.c.b16 %v759, %v754
    %v1200 = vpack.c.b16 %v760, %v755
    %v1201 = vpack.c.b16 %v761, %v756
    %v1202 = vpack.c.b16 %v767, %v762
    %v1203 = vpack.c.b16 %v768, %v763
    %v1204 = vpack.c.b16 %v769, %v764
    %v1205 = vpack.c.b16 %v770, %v765
    %v1206 = vpack.c.b16 %v771, %v766
    %v1207 = vpack.c.b16 %v777, %v772
    %v1208 = vpack.c.b16 %v778, %v773
    %v1209 = vpack.c.b16 %v779, %v774
    %v1210 = vpack.c.b16 %v780, %v775
    %v1211 = vpack.c.b16 %v781, %v776
    %v1212 = vpack.c.b16 %v787, %v782
    %v1213 = vpack.c.b16 %v788, %v783
    %v1214 = vpack.c.b16 %v789, %v784
    %v1215 = vpack.c.b16 %v790, %v785
    %v1216 = vpack.c.b16 %v791, %v786
    %v1217 = vpack.c.b16 %v797, %v792
    %v1218 = vpack.c.b16 %v798, %v793
    %v1219 = vpack.c.b16 %v799, %v794
    %v1220 = vpack.c.b16 %v800, %v795
    %v1221 = vpack.c.b16 %v801, %v796
    %v1222 = vpack.c.b16 %v807, %v802
    %v1223 = vpack.c.b16 %v808, %v803
    %v1224 = vpack.c.b16 %v809, %v804
    %v1225 = vpack.c.b16 %v810, %v805
    %v1226 = vpack.c.b16 %v811, %v806
    %v1227 = vpack.c.b16 %v817, %v812
    %v1228 = vpack.c.b16 %v818, %v813
    %v1229 = vpack.c.b16 %v819, %v814
    %v1230 = vpack.c.b16 %v820, %v815
    %v1231 = vpack.c.b16 %v821, %v816
    %v1232 = vpack.c.b16 %v827, %v822
    %v1233 = vpack.c.b16 %v828, %v823
    %v1234 = vpack.c.b16 %v829, %v824
    %v1235 = vpack.c.b16 %v830, %v825
    %v1236 = vpack.c.b16 %v831, %v826
    %v1237 = vpack.c.b16 %v837, %v832
    %v1238 = vpack.c.b16 %v838, %v833
    %v1239 = vpack.c.b16 %v839, %v834
    %v1240 = vpack.c.b16 %v840, %v835
    %v1241 = vpack.c.b16 %v841, %v836
    %v1242 = vpack.c.b16 %v847, %v842
    %v1243 = vpack.c.b16 %v848, %v843
    %v1244 = vpack.c.b16 %v849, %v844
    %v1245 = vpack.c.b16 %v850, %v845
    %v1246 = vpack.c.b16 %v851, %v846
    %v1247 = vpack.c.b16 %v857, %v852
    %v1248 = vpack.c.b16 %v858, %v853
    %v1249 = vpack.c.b16 %v859, %v854
    %v1250 = vpack.c.b16 %v860, %v855
    %v1251 = vpack.c.b16 %v861, %v856
    %v1252 = vpack.c.b16 %v867, %v862
    %v1253 = vpack.c.b16 %v868, %v863
    %v1254 = vpack.c.b16 %v869, %v864
    %v1255 = vpack.c.b16 %v870, %v865
    %v1256 = vpack.c.b16 %v871, %v866
    %v1257 = vpack.c.b16 %v877, %v872
    %v1258 = vpack.c.b16 %v878, %v873
    %v1259 = vpack.c.b16 %v879, %v874
    %v1260 = vpack.c.b16 %v880, %v875
    %v1261 = vpack.c.b16 %v881, %v876
    %v1262 = vpack.c.b16 %v887, %v882
    %v1263 = vpack.c.b16 %v888, %v883
    %v1264 = vpack.c.b16 %v889, %v884
    %v1265 = vpack.c.b16 %v890, %v885
    %v1266 = vpack.c.b16 %v891, %v886
    %v1267 = vpack.c.b16 %v897, %v892
    %v1268 = vpack.c.b16 %v898, %v893
    %v1269 = vpack.c.b16 %v899, %v894
    %v1270 = vpack.c.b16 %v900, %v895
    %v1271 = vpack.c.b16 %v901, %v896
    %v1272 = vpack.c.b16 %v907, %v902
    %v1273 = vpack.c.b16 %v908, %v903
    %v1274 = vpack.c.b16 %v909, %v904
    %v1275 = vpack.c.b16 %v910, %v905
    %v1276 = vpack.c.b16 %v911, %v906
    %v1277 = vpack.c.b16 %v917, %v912
    %v1278 = vpack.c.b16 %v918, %v913
    %v1279 = vpack.c.b16 %v919, %v914
    %v1280 = vpack.c.b16 %v920, %v915
    %v1281 = vpack.c.b16 %v921, %v916
    %v1282 = vpack.c.b16 %v927, %v922
    %v1283 = vpack.c.b16 %v928, %v923
    %v1284 = vpack.c.b16 %v929, %v924
    %v1285 = vpack.c.b16 %v930, %v925
    %v1286 = vpack.c.b16 %v931, %v926
    %v1287 = vpack.c.b16 %v937, %v932
    %v1288 = vpack.c.b16 %v938, %v933
    %v1289 = vpack.c.b16 %v939, %v934
    %v1290 = vpack.c.b16 %v940, %v935
    %v1291 = vpack.c.b16 %v941, %v936
    %v1292 = vpack.c.b16 %v947, %v942
    %v1293 = vpack.c.b16 %v948, %v943
    %v1294 = vpack.c.b16 %v949, %v944
    %v1295 = vpack.c.b16 %v950, %v945
    %v1296 = vpack.c.b16 %v951, %v946
    %v1297 = vpack.c.b16 %v957, %v952
    %v1298 = vpack.c.b16 %v958, %v953
    %v1299 = vpack.c.b16 %v959, %v954
    %v1300 = vpack.c.b16 %v960, %v955
    %v1301 = vpack.c.b16 %v961, %v956
    %v1302 = vpack.c.b16 %v967, %v962
    %v1303 = vpack.c.b16 %v968, %v963
    %v1304 = vpack.c.b16 %v969, %v964
    %v1305 = vpack.c.b16 %v970, %v965
    %v1306 = vpack.c.b16 %v971, %v966
    %v1307 = vpack.c.b16 %v977, %v972
    %v1308 = vpack.c.b16 %v978, %v973
    %v1309 = vpack.c.b16 %v979, %v974
    %v1310 = vpack.c.b16 %v980, %v975
    %v1311 = vpack.c.b16 %v981, %v976
    %v1312 = vpack.c.b16 %v987, %v982
    %v1313 = vpack.c.b16 %v988, %v983
    %v1314 = vpack.c.b16 %v989, %v984
    %v1315 = vpack.c.b16 %v990, %v985
    %v1316 = vpack.c.b16 %v991, %v986
    %v1317 = vpack.c.b16 %v997, %v992
    %v1318 = vpack.c.b16 %v998, %v993
    %v1319 = vpack.c.b16 %v999, %v994
    %v1320 = vpack.c.b16 %v1000, %v995
    %v1321 = vpack.c.b16 %v1001, %v996
    %v1322 = vpack.c.b16 %v1007, %v1002
    %v1323 = vpack.c.b16 %v1008, %v1003
    %v1324 = vpack.c.b16 %v1009, %v1004
    %v1325 = vpack.c.b16 %v1010, %v1005
    %v1326 = vpack.c.b16 %v1011, %v1006
    %v1327 = vpack.c.b16 %v1017, %v1012
    %v1328 = vpack.c.b16 %v1018, %v1013
    %v1329 = vpack.c.b16 %v1019, %v1014
    %v1330 = vpack.c.b16 %v1020, %v1015
    %v1331 = vpack.c.b16 %v1021, %v1016
    %v1332 = vpack.c.b16 %v1027, %v1022
    %v1333 = vpack.c.b16 %v1028, %v1023
    %v1334 = vpack.c.b16 %v1029, %v1024
    %v1335 = vpack.c.b16 %v1030, %v1025
    %v1336 = vpack.c.b16 %v1031, %v1026
    %v1337 = vpack.c.b16 %v1037, %v1032
    %v1338 = vpack.c.b16 %v1038, %v1033
    %v1339 = vpack.c.b16 %v1039, %v1034
    %v1340 = vpack.c.b16 %v1040, %v1035
    %v1341 = vpack.c.b16 %v1041, %v1036
    %v1342 = vpack.c.b16 %v1047, %v1042
    %v1343 = vpack.c.b16 %v1048, %v1043
    %v1344 = vpack.c.b16 %v1049, %v1044
    %v1345 = vpack.c.b16 %v1050, %v1045
    %v1346 = vpack.c.b16 %v1051, %v1046
    %v1347 = vpack.c.b16 %v1057, %v1052
    %v1348 = vpack.c.b16 %v1058, %v1053
    %v1349 = vpack.c.b16 %v1059, %v1054
    %v1350 = vpack.c.b16 %v1060, %v1055
    %v1351 = vpack.c.b16 %v1061, %v1056
    %v1352 = vpack.c.b16 %v1067, %v1062
    %v1353 = vpack.c.b16 %v1068, %v1063
    %v1354 = vpack.c.b16 %v1069, %v1064
    %v1355 = vpack.c.b16 %v1070, %v1065
    %v1356 = vpack.c.b16 %v1071, %v1066
    %v1357 = vpack.c.b16 %v1077, %v1072
    %v1358 = vpack.c.b16 %v1078, %v1073
    %v1359 = vpack.c.b16 %v1079, %v1074
    %v1360 = vpack.c.b16 %v1080, %v1075
    %v1361 = vpack.c.b16 %v1081, %v1076
    %v1362 = vpack.c.b16 %v1087, %v1082
    %v1363 = vpack.c.b16 %v1088, %v1083
    %v1364 = vpack.c.b16 %v1089, %v1084
    %v1365 = vpack.c.b16 %v1090, %v1085
    %v1366 = vpack.c.b16 %v1091, %v1086
    %v1367 = vpack.c.b16 %v1097, %v1092
    %v1368 = vpack.c.b16 %v1098, %v1093
    %v1369 = vpack.c.b16 %v1099, %v1094
    %v1370 = vpack.c.b16 %v1100, %v1095
    %v1371 = vpack.c.b16 %v1101, %v1096
    %v1372 = vpack.c.b16 %v1107, %v1102
    %v1373 = vpack.c.b16 %v1108, %v1103
    %v1374 = vpack.c.b16 %v1109, %v1104
    %v1375 = vpack.c.b16 %v1110, %v1105
    %v1376 = vpack.c.b16 %v1111, %v1106
    %v1377 = vpack.c.b16 %v1117, %v1112
    %v1378 = vpack.c.b16 %v1118, %v1113
    %v1379 = vpack.c.b16 %v1119, %v1114
    %v1380 = vpack.c.b16 %v1120, %v1115
    %v1381 = vpack.c.b16 %v1121, %v1116
    %v1382 = vpack.c.b16 %v1127, %v1122
    %v1383 = vpack.c.b16 %v1128, %v1123
    %v1384 = vpack.c.b16 %v1129, %v1124
    %v1385 = vpack.c.b16 %v1130, %v1125
    %v1386 = vpack.c.b16 %v1131, %v1126
    %v1387 = vpack.c.b16 %v1137, %v1132
    %v1388 = vpack.c.b16 %v1138, %v1133
    %v1389 = vpack.c.b16 %v1139, %v1134
    %v1390 = vpack.c.b16 %v1140, %v1135
    %v1391 = vpack.c.b16 %v1141, %v1136
    %v1392 = vpack.c.b16 %v1147, %v1142
    %v1393 = vpack.c.b16 %v1148, %v1143
    %v1394 = vpack.c.b16 %v1149, %v1144
    %v1395 = vpack.c.b16 %v1150, %v1145
    %v1396 = vpack.c.b16 %v1151, %v1146
    %v1397 = vpack.c.b16 %v1157, %v1152
    %v1398 = vpack.c.b16 %v1158, %v1153
    %v1399 = vpack.c.b16 %v1159, %v1154
    %v1400 = vpack.c.b16 %v1160, %v1155
    %v1401 = vpack.c.b16 %v1161, %v1156
    %1642 = vmatprep.subr.bf16.mxu0 %v1163
    %1643 = vmatpush1.bf16.msra.mxu0 %v1162
    %1644 = vmatprep.subr.bf16.mxu0 %v1168
    %1645 = vmatpush1.bf16.msra.mxu0 %v1167
    %1646 = vmatprep.subr.bf16.mxu0 %v1173
    %1647 = vmatpush1.bf16.msra.mxu0 %v1172
    %1648 = vmatprep.subr.bf16.mxu0 %v1178
    %1649 = vmatpush1.bf16.msra.mxu0 %v1177
    %1650 = vmatprep.subr.bf16.mxu0 %v1183
    %1651 = vmatpush1.bf16.msra.mxu0 %v1182
    %1652 = vmatprep.subr.bf16.mxu0 %v1188
    %1653 = vmatpush1.bf16.msra.mxu0 %v1187
    %1654 = vmatprep.subr.bf16.mxu0 %v1193
    %1655 = vmatpush1.bf16.msra.mxu0 %v1192
    %1656 = vmatprep.subr.bf16.mxu0 %v1198
    %1657 = vmatpush1.bf16.msra.mxu0 %v1197
    %1658 = vmatprep.subr.bf16.mxu0 %v1203
    %1659 = vmatpush1.bf16.msra.mxu0 %v1202
    %1660 = vmatprep.subr.bf16.mxu0 %v1208
    %1661 = vmatpush1.bf16.msra.mxu0 %v1207
    %1662 = vmatprep.subr.bf16.mxu0 %v1213
    %1663 = vmatpush1.bf16.msra.mxu0 %v1212
    %1664 = vmatprep.subr.bf16.mxu0 %v1218
    %1665 = vmatpush1.bf16.msra.mxu0 %v1217
    %1666 = vmatprep.subr.bf16.mxu0 %v1223
    %1667 = vmatpush1.bf16.msra.mxu0 %v1222
    %1668 = vmatprep.subr.bf16.mxu0 %v1228
    %1669 = vmatpush1.bf16.msra.mxu0 %v1227
    %1670 = vmatprep.subr.bf16.mxu0 %v1233
    %1671 = vmatpush1.bf16.msra.mxu0 %v1232
    %1672 = vmatprep.subr.bf16.mxu0 %v1238
    %1673 = vmatpush1.bf16.msra.mxu0 %v1237
    %1674 = vmatprep.mubr.bf16.mxu0 %v383
    %1675 = vmatmul.mubr.bf16.gmra.mrb[0].mxu0 %v382
    %v1676 = vpop.f32.mrb[0].mxu0
    %v1677 = vadd.f32 %v351, %v1676
    %v1678 = vpop.f32.mrb[0].mxu0
    %v1679 = vadd.f32 %v355, %v1678
    %v1680 = vpop.f32.mrb[0].mxu0
    %v1681 = vpop.f32.mrb[0].mxu0
    %1682 = vdwg.mxu0
    %1683 = vmatprep.subr.bf16.mxu0 %v1243
    %1684 = vmatpush1.bf16.msra.mxu0 %v1242
    %1685 = vmatprep.subr.bf16.mxu0 %v1248
    %1686 = vmatpush1.bf16.msra.mxu0 %v1247
    %1687 = vmatprep.subr.bf16.mxu0 %v1253
    %1688 = vmatpush1.bf16.msra.mxu0 %v1252
    %1689 = vmatprep.subr.bf16.mxu0 %v1258
    %1690 = vmatpush1.bf16.msra.mxu0 %v1257
    %1691 = vmatprep.subr.bf16.mxu0 %v1263
    %1692 = vmatpush1.bf16.msra.mxu0 %v1262
    %1693 = vmatprep.subr.bf16.mxu0 %v1268
    %1694 = vmatpush1.bf16.msra.mxu0 %v1267
    %1695 = vmatprep.subr.bf16.mxu0 %v1273
    %1696 = vmatpush1.bf16.msra.mxu0 %v1272
    %1697 = vmatprep.subr.bf16.mxu0 %v1278
    %1698 = vmatpush1.bf16.msra.mxu0 %v1277
    %1699 = vmatprep.subr.bf16.mxu0 %v1283
    %1700 = vmatpush1.bf16.msra.mxu0 %v1282
    %1701 = vmatprep.subr.bf16.mxu0 %v1288
    %1702 = vmatpush1.bf16.msra.mxu0 %v1287
    %1703 = vmatprep.subr.bf16.mxu0 %v1293
    %1704 = vmatpush1.bf16.msra.mxu0 %v1292
    %1705 = vmatprep.subr.bf16.mxu0 %v1298
    %1706 = vmatpush1.bf16.msra.mxu0 %v1297
    %1707 = vmatprep.subr.bf16.mxu0 %v1303
    %1708 = vmatpush1.bf16.msra.mxu0 %v1302
    %1709 = vmatprep.subr.bf16.mxu0 %v1308
    %1710 = vmatpush1.bf16.msra.mxu0 %v1307
    %1711 = vmatprep.subr.bf16.mxu0 %v1313
    %1712 = vmatpush1.bf16.msra.mxu0 %v1312
    %1713 = vmatprep.subr.bf16.mxu0 %v1318
    %1714 = vmatpush1.bf16.msra.mxu0 %v1317
    %1715 = vmatprep.mubr.bf16.mxu0 %v385
    %1716 = vmatmul.mubr.bf16.gmra.mrb[0].mxu0 %v384
    %v1717 = vpop.f32.mrb[0].mxu0
    %v1718 = vadd.f32 %v1677, %v1717
    %v1719 = vpop.f32.mrb[0].mxu0
    %v1720 = vadd.f32 %v1679, %v1719
    %v1721 = vpop.f32.mrb[0].mxu0
    %v1722 = vpop.f32.mrb[0].mxu0
    %1723 = vdwg.mxu0
    %1724 = vmatprep.subr.bf16.mxu0 %v1323
    %1725 = vmatpush1.bf16.msra.mxu0 %v1322
    %1726 = vmatprep.subr.bf16.mxu0 %v1328
    %1727 = vmatpush1.bf16.msra.mxu0 %v1327
    %1728 = vmatprep.subr.bf16.mxu0 %v1333
    %1729 = vmatpush1.bf16.msra.mxu0 %v1332
    %1730 = vmatprep.subr.bf16.mxu0 %v1338
    %1731 = vmatpush1.bf16.msra.mxu0 %v1337
    %1732 = vmatprep.subr.bf16.mxu0 %v1343
    %1733 = vmatpush1.bf16.msra.mxu0 %v1342
    %1734 = vmatprep.subr.bf16.mxu0 %v1348
    %1735 = vmatpush1.bf16.msra.mxu0 %v1347
    %1736 = vmatprep.subr.bf16.mxu0 %v1353
    %1737 = vmatpush1.bf16.msra.mxu0 %v1352
    %1738 = vmatprep.subr.bf16.mxu0 %v1358
    %1739 = vmatpush1.bf16.msra.mxu0 %v1357
    %1740 = vmatprep.subr.bf16.mxu0 %v1363
    %1741 = vmatpush1.bf16.msra.mxu0 %v1362
    %1742 = vmatprep.subr.bf16.mxu0 %v1368
    %1743 = vmatpush1.bf16.msra.mxu0 %v1367
    %1744 = vmatprep.subr.bf16.mxu0 %v1373
    %1745 = vmatpush1.bf16.msra.mxu0 %v1372
    %1746 = vmatprep.subr.bf16.mxu0 %v1378
    %1747 = vmatpush1.bf16.msra.mxu0 %v1377
    %1748 = vmatprep.subr.bf16.mxu0 %v1383
    %1749 = vmatpush1.bf16.msra.mxu0 %v1382
    %1750 = vmatprep.subr.bf16.mxu0 %v1388
    %1751 = vmatpush1.bf16.msra.mxu0 %v1387
    %1752 = vmatprep.subr.bf16.mxu0 %v1393
    %1753 = vmatpush1.bf16.msra.mxu0 %v1392
    %1754 = vmatprep.subr.bf16.mxu0 %v1398
    %1755 = vmatpush1.bf16.msra.mxu0 %v1397
    %1756 = vmatprep.mubr.bf16.mxu0 %v387
    %1757 = vmatmul.mubr.bf16.gmra.mrb[0].mxu0 %v386
    %v1758 = vpop.f32.mrb[0].mxu0
    %v1759 = vadd.f32 %v1718, %v1758
    %v1760 = vpop.f32.mrb[0].mxu0
    %v1761 = vadd.f32 %v1720, %v1760
    %v1762 = vpop.f32.mrb[0].mxu0
    %v1763 = vpop.f32.mrb[0].mxu0
    %1764 = vdwg.mxu0
    %1765 = vmatprep.subr.bf16.mxu0 %v1165
    %1766 = vmatpush1.bf16.msra.mxu0 %v1164
    %1767 = vmatprep.subr.bf16.mxu0 %v1170
    %1768 = vmatpush1.bf16.msra.mxu0 %v1169
    %1769 = vmatprep.subr.bf16.mxu0 %v1175
    %1770 = vmatpush1.bf16.msra.mxu0 %v1174
    %1771 = vmatprep.subr.bf16.mxu0 %v1180
    %1772 = vmatpush1.bf16.msra.mxu0 %v1179
    %1773 = vmatprep.subr.bf16.mxu0 %v1185
    %1774 = vmatpush1.bf16.msra.mxu0 %v1184
    %1775 = vmatprep.subr.bf16.mxu0 %v1190
    %1776 = vmatpush1.bf16.msra.mxu0 %v1189
    %1777 = vmatprep.subr.bf16.mxu0 %v1195
    %1778 = vmatpush1.bf16.msra.mxu0 %v1194
    %1779 = vmatprep.subr.bf16.mxu0 %v1200
    %1780 = vmatpush1.bf16.msra.mxu0 %v1199
    %1781 = vmatprep.subr.bf16.mxu0 %v1205
    %1782 = vmatpush1.bf16.msra.mxu0 %v1204
    %1783 = vmatprep.subr.bf16.mxu0 %v1210
    %1784 = vmatpush1.bf16.msra.mxu0 %v1209
    %1785 = vmatprep.subr.bf16.mxu0 %v1215
    %1786 = vmatpush1.bf16.msra.mxu0 %v1214
    %1787 = vmatprep.subr.bf16.mxu0 %v1220
    %1788 = vmatpush1.bf16.msra.mxu0 %v1219
    %1789 = vmatprep.subr.bf16.mxu0 %v1225
    %1790 = vmatpush1.bf16.msra.mxu0 %v1224
    %1791 = vmatprep.subr.bf16.mxu0 %v1230
    %1792 = vmatpush1.bf16.msra.mxu0 %v1229
    %1793 = vmatprep.subr.bf16.mxu0 %v1235
    %1794 = vmatpush1.bf16.msra.mxu0 %v1234
    %1795 = vmatprep.subr.bf16.mxu0 %v1240
    %1796 = vmatpush1.bf16.msra.mxu0 %v1239
    %1797 = vmatprep.mubr.bf16.mxu0 %v383
    %1798 = vmatmul.mubr.bf16.gmra.mrb[0].mxu0 %v382
    %v1799 = vpop.f32.mrb[0].mxu0
    %v1800 = vadd.f32 %v359, %v1799
    %v1801 = vpop.f32.mrb[0].mxu0
    %v1802 = vadd.f32 %v363, %v1801
    %v1803 = vpop.f32.mrb[0].mxu0
    %v1804 = vpop.f32.mrb[0].mxu0
    %1805 = vdwg.mxu0
    %1806 = vmatprep.subr.bf16.mxu0 %v1245
    %1807 = vmatpush1.bf16.msra.mxu0 %v1244
    %1808 = vmatprep.subr.bf16.mxu0 %v1250
    %1809 = vmatpush1.bf16.msra.mxu0 %v1249
    %1810 = vmatprep.subr.bf16.mxu0 %v1255
    %1811 = vmatpush1.bf16.msra.mxu0 %v1254
    %1812 = vmatprep.subr.bf16.mxu0 %v1260
    %1813 = vmatpush1.bf16.msra.mxu0 %v1259
    %1814 = vmatprep.subr.bf16.mxu0 %v1265
    %1815 = vmatpush1.bf16.msra.mxu0 %v1264
    %1816 = vmatprep.subr.bf16.mxu0 %v1270
    %1817 = vmatpush1.bf16.msra.mxu0 %v1269
    %1818 = vmatprep.subr.bf16.mxu0 %v1275
    %1819 = vmatpush1.bf16.msra.mxu0 %v1274
    %1820 = vmatprep.subr.bf16.mxu0 %v1280
    %1821 = vmatpush1.bf16.msra.mxu0 %v1279
    %1822 = vmatprep.subr.bf16.mxu0 %v1285
    %1823 = vmatpush1.bf16.msra.mxu0 %v1284
    %1824 = vmatprep.subr.bf16.mxu0 %v1290
    %1825 = vmatpush1.bf16.msra.mxu0 %v1289
    %1826 = vmatprep.subr.bf16.mxu0 %v1295
    %1827 = vmatpush1.bf16.msra.mxu0 %v1294
    %1828 = vmatprep.subr.bf16.mxu0 %v1300
    %1829 = vmatpush1.bf16.msra.mxu0 %v1299
    %1830 = vmatprep.subr.bf16.mxu0 %v1305
    %1831 = vmatpush1.bf16.msra.mxu0 %v1304
    %1832 = vmatprep.subr.bf16.mxu0 %v1310
    %1833 = vmatpush1.bf16.msra.mxu0 %v1309
    %1834 = vmatprep.subr.bf16.mxu0 %v1315
    %1835 = vmatpush1.bf16.msra.mxu0 %v1314
    %1836 = vmatprep.subr.bf16.mxu0 %v1320
    %1837 = vmatpush1.bf16.msra.mxu0 %v1319
    %1838 = vmatprep.mubr.bf16.mxu0 %v385
    %1839 = vmatmul.mubr.bf16.gmra.mrb[0].mxu0 %v384
    %v1840 = vpop.f32.mrb[0].mxu0
    %v1841 = vadd.f32 %v1800, %v1840
    %v1842 = vpop.f32.mrb[0].mxu0
    %v1843 = vadd.f32 %v1802, %v1842
    %v1844 = vpop.f32.mrb[0].mxu0
    %v1845 = vpop.f32.mrb[0].mxu0
    %1846 = vdwg.mxu0
    %1847 = vmatprep.subr.bf16.mxu0 %v1325
    %1848 = vmatpush1.bf16.msra.mxu0 %v1324
    %1849 = vmatprep.subr.bf16.mxu0 %v1330
    %1850 = vmatpush1.bf16.msra.mxu0 %v1329
    %1851 = vmatprep.subr.bf16.mxu0 %v1335
    %1852 = vmatpush1.bf16.msra.mxu0 %v1334
    %1853 = vmatprep.subr.bf16.mxu0 %v1340
    %1854 = vmatpush1.bf16.msra.mxu0 %v1339
    %1855 = vmatprep.subr.bf16.mxu0 %v1345
    %1856 = vmatpush1.bf16.msra.mxu0 %v1344
    %1857 = vmatprep.subr.bf16.mxu0 %v1350
    %1858 = vmatpush1.bf16.msra.mxu0 %v1349
    %1859 = vmatprep.subr.bf16.mxu0 %v1355
    %1860 = vmatpush1.bf16.msra.mxu0 %v1354
    %1861 = vmatprep.subr.bf16.mxu0 %v1360
    %1862 = vmatpush1.bf16.msra.mxu0 %v1359
    %1863 = vmatprep.subr.bf16.mxu0 %v1365
    %1864 = vmatpush1.bf16.msra.mxu0 %v1364
    %1865 = vmatprep.subr.bf16.mxu0 %v1370
    %1866 = vmatpush1.bf16.msra.mxu0 %v1369
    %1867 = vmatprep.subr.bf16.mxu0 %v1375
    %1868 = vmatpush1.bf16.msra.mxu0 %v1374
    %1869 = vmatprep.subr.bf16.mxu0 %v1380
    %1870 = vmatpush1.bf16.msra.mxu0 %v1379
    %1871 = vmatprep.subr.bf16.mxu0 %v1385
    %1872 = vmatpush1.bf16.msra.mxu0 %v1384
    %1873 = vmatprep.subr.bf16.mxu0 %v1390
    %1874 = vmatpush1.bf16.msra.mxu0 %v1389
    %1875 = vmatprep.subr.bf16.mxu0 %v1395
    %1876 = vmatpush1.bf16.msra.mxu0 %v1394
    %1877 = vmatprep.subr.bf16.mxu0 %v1400
    %1878 = vmatpush1.bf16.msra.mxu0 %v1399
    %1879 = vmatprep.mubr.bf16.mxu0 %v387
    %1880 = vmatmul.mubr.bf16.gmra.mrb[0].mxu0 %v386
    %v1881 = vpop.f32.mrb[0].mxu0
    %v1882 = vadd.f32 %v1841, %v1881
    %v1883 = vpop.f32.mrb[0].mxu0
    %v1884 = vadd.f32 %v1843, %v1883
    %v1885 = vpop.f32.mrb[0].mxu0
    %v1886 = vpop.f32.mrb[0].mxu0
    %1887 = vdwg.mxu0
    %1888 = vmatprep.subr.bf16.mxu0 0
    %1889 = vmatpush1.bf16.msra.mxu0 %v1166
    %1890 = vmatprep.subr.bf16.mxu0 0
    %1891 = vmatpush1.bf16.msra.mxu0 %v1171
    %1892 = vmatprep.subr.bf16.mxu0 0
    %1893 = vmatpush1.bf16.msra.mxu0 %v1176
    %1894 = vmatprep.subr.bf16.mxu0 0
    %1895 = vmatpush1.bf16.msra.mxu0 %v1181
    %1896 = vmatprep.subr.bf16.mxu0 0
    %1897 = vmatpush1.bf16.msra.mxu0 %v1186
    %1898 = vmatprep.subr.bf16.mxu0 0
    %1899 = vmatpush1.bf16.msra.mxu0 %v1191
    %1900 = vmatprep.subr.bf16.mxu0 0
    %1901 = vmatpush1.bf16.msra.mxu0 %v1196
    %1902 = vmatprep.subr.bf16.mxu0 0
    %1903 = vmatpush1.bf16.msra.mxu0 %v1201
    %1904 = vmatprep.subr.bf16.mxu0 0
    %1905 = vmatpush1.bf16.msra.mxu0 %v1206
    %1906 = vmatprep.subr.bf16.mxu0 0
    %1907 = vmatpush1.bf16.msra.mxu0 %v1211
    %1908 = vmatprep.subr.bf16.mxu0 0
    %1909 = vmatpush1.bf16.msra.mxu0 %v1216
    %1910 = vmatprep.subr.bf16.mxu0 0
    %1911 = vmatpush1.bf16.msra.mxu0 %v1221
    %1912 = vmatprep.subr.bf16.mxu0 0
    %1913 = vmatpush1.bf16.msra.mxu0 %v1226
    %1914 = vmatprep.subr.bf16.mxu0 0
    %1915 = vmatpush1.bf16.msra.mxu0 %v1231
    %1916 = vmatprep.subr.bf16.mxu0 0
    %1917 = vmatpush1.bf16.msra.mxu0 %v1236
    %1918 = vmatprep.subr.bf16.mxu0 0
    %1919 = vmatpush1.bf16.msra.mxu0 %v1241
    %1920 = vmatprep.mubr.bf16.mxu0 %v383
    %1921 = vmatmul.mubr.bf16.gmra.mrb[0].mxu0 %v382
    %v1922 = vpop.f32.mrb[0].mxu0
    %v1923 = vadd.f32 %v367, %v1922
    %v1924 = vpop.f32.mrb[0].mxu0
    %v1925 = vpop.f32.mrb[0].mxu0
    %v1926 = vpop.f32.mrb[0].mxu0
    %1927 = vdwg.mxu0
    %1928 = vmatprep.subr.bf16.mxu0 0
    %1929 = vmatpush1.bf16.msra.mxu0 %v1246
    %1930 = vmatprep.subr.bf16.mxu0 0
    %1931 = vmatpush1.bf16.msra.mxu0 %v1251
    %1932 = vmatprep.subr.bf16.mxu0 0
    %1933 = vmatpush1.bf16.msra.mxu0 %v1256
    %1934 = vmatprep.subr.bf16.mxu0 0
    %1935 = vmatpush1.bf16.msra.mxu0 %v1261
    %1936 = vmatprep.subr.bf16.mxu0 0
    %1937 = vmatpush1.bf16.msra.mxu0 %v1266
    %1938 = vmatprep.subr.bf16.mxu0 0
    %1939 = vmatpush1.bf16.msra.mxu0 %v1271
    %1940 = vmatprep.subr.bf16.mxu0 0
    %1941 = vmatpush1.bf16.msra.mxu0 %v1276
    %1942 = vmatprep.subr.bf16.mxu0 0
    %1943 = vmatpush1.bf16.msra.mxu0 %v1281
    %1944 = vmatprep.subr.bf16.mxu0 0
    %1945 = vmatpush1.bf16.msra.mxu0 %v1286
    %1946 = vmatprep.subr.bf16.mxu0 0
    %1947 = vmatpush1.bf16.msra.mxu0 %v1291
    %1948 = vmatprep.subr.bf16.mxu0 0
    %1949 = vmatpush1.bf16.msra.mxu0 %v1296
    %1950 = vmatprep.subr.bf16.mxu0 0
    %1951 = vmatpush1.bf16.msra.mxu0 %v1301
    %1952 = vmatprep.subr.bf16.mxu0 0
    %1953 = vmatpush1.bf16.msra.mxu0 %v1306
    %1954 = vmatprep.subr.bf16.mxu0 0
    %1955 = vmatpush1.bf16.msra.mxu0 %v1311
    %1956 = vmatprep.subr.bf16.mxu0 0
    %1957 = vmatpush1.bf16.msra.mxu0 %v1316
    %1958 = vmatprep.subr.bf16.mxu0 0
    %1959 = vmatpush1.bf16.msra.mxu0 %v1321
    %1960 = vmatprep.mubr.bf16.mxu0 %v385
    %1961 = vmatmul.mubr.bf16.gmra.mrb[0].mxu0 %v384
    %v1962 = vpop.f32.mrb[0].mxu0
    %v1963 = vadd.f32 %v1923, %v1962
    %v1964 = vpop.f32.mrb[0].mxu0
    %v1965 = vpop.f32.mrb[0].mxu0
    %v1966 = vpop.f32.mrb[0].mxu0
    %1967 = vdwg.mxu0
    %1968 = vmatprep.subr.bf16.mxu0 0
    %1969 = vmatpush1.bf16.msra.mxu0 %v1326
    %1970 = vmatprep.subr.bf16.mxu0 0
    %1971 = vmatpush1.bf16.msra.mxu0 %v1331
    %1972 = vmatprep.subr.bf16.mxu0 0
    %1973 = vmatpush1.bf16.msra.mxu0 %v1336
    %1974 = vmatprep.subr.bf16.mxu0 0
    %1975 = vmatpush1.bf16.msra.mxu0 %v1341
    %1976 = vmatprep.subr.bf16.mxu0 0
    %1977 = vmatpush1.bf16.msra.mxu0 %v1346
    %1978 = vmatprep.subr.bf16.mxu0 0
    %1979 = vmatpush1.bf16.msra.mxu0 %v1351
    %1980 = vmatprep.subr.bf16.mxu0 0
    %1981 = vmatpush1.bf16.msra.mxu0 %v1356
    %1982 = vmatprep.subr.bf16.mxu0 0
    %1983 = vmatpush1.bf16.msra.mxu0 %v1361
    %1984 = vmatprep.subr.bf16.mxu0 0
    %1985 = vmatpush1.bf16.msra.mxu0 %v1366
    %1986 = vmatprep.subr.bf16.mxu0 0
    %1987 = vmatpush1.bf16.msra.mxu0 %v1371
    %1988 = vmatprep.subr.bf16.mxu0 0
    %1989 = vmatpush1.bf16.msra.mxu0 %v1376
    %1990 = vmatprep.subr.bf16.mxu0 0
    %1991 = vmatpush1.bf16.msra.mxu0 %v1381
    %1992 = vmatprep.subr.bf16.mxu0 0
    %1993 = vmatpush1.bf16.msra.mxu0 %v1386
    %1994 = vmatprep.subr.bf16.mxu0 0
    %1995 = vmatpush1.bf16.msra.mxu0 %v1391
    %1996 = vmatprep.subr.bf16.mxu0 0
    %1997 = vmatpush1.bf16.msra.mxu0 %v1396
    %1998 = vmatprep.subr.bf16.mxu0 0
    %1999 = vmatpush1.bf16.msra.mxu0 %v1401
    %2000 = vmatprep.mubr.bf16.mxu0 %v387
    %2001 = vmatmul.mubr.bf16.gmra.mrb[0].mxu0 %v386
    %v2002 = vpop.f32.mrb[0].mxu0
    %v2003 = vadd.f32 %v1963, %v2002
    %v2004 = vpop.f32.mrb[0].mxu0
    %v2005 = vpop.f32.mrb[0].mxu0
    %v2006 = vpop.f32.mrb[0].mxu0
    %2007 = vdwg.mxu0
    %v2008 = vtanh.pop %v1759
    %v2009 = vtanh.pop %v1761
    %v2010 = vtanh.pop %v1882
    %v2011 = vtanh.pop %v1884
    %v2012 = vtanh.pop %v2003
    %v2013 = vpack.c.bf16 %v2008, %v2008
    %v2014 = vpack.c.bf16 %v2009, %v2009
    %v2015 = vpack.c.bf16 %v2010, %v2010
    %v2016 = vpack.c.bf16 %v2011, %v2011
    %v2017 = vpack.c.bf16 %v2012, %v2012
    %v2018 = vld [vmem:[#allocation4] sm:$0xf]
    %v2019 = vld [vmem:[#allocation4 + $0x4] sm:$0xf]
    %v2020 = vld [vmem:[#allocation4 + $0x8] sm:$0xf]
    %v2021 = vld [vmem:[#allocation4 + $0xc] sm:$0xf]
    %v2022 = vld [vmem:[#allocation4 + $0x10] sm:$0xf]
    %v2023 = vld [vmem:[#allocation4 + $0x14] sm:$0xf]
    %v2024 = vld [vmem:[#allocation4 + $0x18] sm:$0xf]
    %v2025 = vld [vmem:[#allocation4 + $0x1c] sm:$0xf]
    %v2026 = vld [vmem:[#allocation4 + $0x20] sm:$0xf]
    %v2027 = vld [vmem:[#allocation4 + $0x24] sm:$0xf]
    %v2028 = vld [vmem:[#allocation4 + $0x28] sm:$0xf]
    %v2029 = vld [vmem:[#allocation4 + $0x2c] sm:$0xf]
    %v2030 = vld [vmem:[#allocation4 + $0x30] sm:$0xf]
    %v2031 = vld [vmem:[#allocation4 + $0x34] sm:$0xf]
    %v2032 = vld [vmem:[#allocation4 + $0x38] sm:$0xf]
    %v2033 = vld [vmem:[#allocation4 + $0x3c] sm:$0xf]
    %v2034 = vld [vmem:[#allocation4 + $0x40] sm:$0xf]
    %v2035 = vld [vmem:[#allocation4 + $0x44] sm:$0xf]
    %v2036 = vld [vmem:[#allocation4 + $0x48] sm:$0xf]
    %v2037 = vld [vmem:[#allocation4 + $0x4c] sm:$0xf]
    %v2038 = vld [vmem:[#allocation4 + $0x50] sm:$0xf]
    %v2039 = vld [vmem:[#allocation4 + $0x54] sm:$0xf]
    %v2040 = vld [vmem:[#allocation4 + $0x58] sm:$0xf]
    %v2041 = vld [vmem:[#allocation4 + $0x5c] sm:$0xf]
    %v2042 = vld [vmem:[#allocation4 + $0x60] sm:$0xf]
    %v2043 = vld [vmem:[#allocation4 + $0x64] sm:$0xf]
    %v2044 = vld [vmem:[#allocation4 + $0x68] sm:$0xf]
    %v2045 = vld [vmem:[#allocation4 + $0x6c] sm:$0xf]
    %v2046 = vld [vmem:[#allocation4 + $0x70] sm:$0xf]
    %v2047 = vld [vmem:[#allocation4 + $0x74] sm:$0xf]
    %v2048 = vld [vmem:[#allocation4 + $0x78] sm:$0xf]
    %v2049 = vld [vmem:[#allocation4 + $0x7c] sm:$0xf]
    %v2050 = vld [vmem:[#allocation4 + $0x80] sm:$0xf]
    %v2051 = vld [vmem:[#allocation4 + $0x84] sm:$0xf]
    %v2052 = vld [vmem:[#allocation4 + $0x88] sm:$0xf]
    %v2053 = vld [vmem:[#allocation4 + $0x8c] sm:$0xf]
    %v2054 = vld [vmem:[#allocation4 + $0x90] sm:$0xf]
    %v2055 = vld [vmem:[#allocation4 + $0x94] sm:$0xf]
    %v2056 = vld [vmem:[#allocation4 + $0x98] sm:$0xf]
    %v2057 = vld [vmem:[#allocation4 + $0x9c] sm:$0xf]
    %v2058 = vld [vmem:[#allocation4 + $0xa0] sm:$0xf]
    %v2059 = vld [vmem:[#allocation4 + $0xa4] sm:$0xf]
    %v2060 = vld [vmem:[#allocation4 + $0xa8] sm:$0xf]
    %v2061 = vld [vmem:[#allocation4 + $0xac] sm:$0xf]
    %v2062 = vld [vmem:[#allocation4 + $0xb0] sm:$0xf]
    %v2063 = vld [vmem:[#allocation4 + $0xb4] sm:$0xf]
    %v2064 = vld [vmem:[#allocation4 + $0xb8] sm:$0xf]
    %v2065 = vld [vmem:[#allocation4 + $0xbc] sm:$0xf]
    %v2066 = vld [vmem:[#allocation4 + $0xc0] sm:$0xf]
    %v2067 = vld [vmem:[#allocation4 + $0xc4] sm:$0xf]
    %v2068 = vld [vmem:[#allocation4 + $0xc8] sm:$0xf]
    %v2069 = vld [vmem:[#allocation4 + $0xcc] sm:$0xf]
    %v2070 = vld [vmem:[#allocation4 + $0xd0] sm:$0xf]
    %v2071 = vld [vmem:[#allocation4 + $0xd4] sm:$0xf]
    %v2072 = vld [vmem:[#allocation4 + $0xd8] sm:$0xf]
    %v2073 = vld [vmem:[#allocation4 + $0xdc] sm:$0xf]
    %v2074 = vld [vmem:[#allocation4 + $0xe0] sm:$0xf]
    %v2075 = vld [vmem:[#allocation4 + $0xe4] sm:$0xf]
    %v2076 = vld [vmem:[#allocation4 + $0xe8] sm:$0xf]
    %v2077 = vld [vmem:[#allocation4 + $0xec] sm:$0xf]
    %v2078 = vld [vmem:[#allocation4 + $0xf0] sm:$0xf]
    %v2079 = vld [vmem:[#allocation4 + $0xf4] sm:$0xf]
    %v2080 = vld [vmem:[#allocation4 + $0xf8] sm:$0xf]
    %v2081 = vld [vmem:[#allocation4 + $0xfc] sm:$0xf]
    %v2082 = vld [vmem:[#allocation4 + $0x100] sm:$0xf]
    %v2083 = vld [vmem:[#allocation4 + $0x104] sm:$0xf]
    %v2084 = vld [vmem:[#allocation4 + $0x108] sm:$0xf]
    %v2085 = vld [vmem:[#allocation4 + $0x10c] sm:$0xf]
    %v2086 = vld [vmem:[#allocation4 + $0x110] sm:$0xf]
    %v2087 = vld [vmem:[#allocation4 + $0x114] sm:$0xf]
    %v2088 = vld [vmem:[#allocation4 + $0x118] sm:$0xf]
    %v2089 = vld [vmem:[#allocation4 + $0x11c] sm:$0xf]
    %v2090 = vld [vmem:[#allocation4 + $0x120] sm:$0xf]
    %v2091 = vld [vmem:[#allocation4 + $0x124] sm:$0xf]
    %v2092 = vld [vmem:[#allocation4 + $0x128] sm:$0xf]
    %v2093 = vld [vmem:[#allocation4 + $0x12c] sm:$0xf]
    %v2094 = vld [vmem:[#allocation4 + $0x130] sm:$0xf]
    %v2095 = vld [vmem:[#allocation4 + $0x134] sm:$0xf]
    %v2096 = vld [vmem:[#allocation4 + $0x138] sm:$0xf]
    %v2097 = vld [vmem:[#allocation4 + $0x13c] sm:$0xf]
    %v2098 = vld [vmem:[%s4] sm:$0x1]
    %v2100 = vlaneseq
    %v2101 = vshrl.u32 %v2100, 7
    %v2102 = vsub.s32 0, %v2101
    %v2103 = vrot.slane %v2098, %v2102
    %v2185 = vunpack.c.l.b16 %v2018
    %v2186 = vunpack.c.l.b16 %v2019
    %v2187 = vunpack.c.l.b16 %v2020
    %v2188 = vunpack.c.l.b16 %v2021
    %v2189 = vunpack.c.l.b16 %v2022
    %v2190 = vunpack.c.l.b16 %v2023
    %v2191 = vunpack.c.l.b16 %v2024
    %v2192 = vunpack.c.l.b16 %v2025
    %v2193 = vunpack.c.l.b16 %v2026
    %v2194 = vunpack.c.l.b16 %v2027
    %v2195 = vunpack.c.l.b16 %v2028
    %v2196 = vunpack.c.l.b16 %v2029
    %v2197 = vunpack.c.l.b16 %v2030
    %v2198 = vunpack.c.l.b16 %v2031
    %v2199 = vunpack.c.l.b16 %v2032
    %v2200 = vunpack.c.l.b16 %v2033
    %v2201 = vunpack.c.l.b16 %v2034
    %v2202 = vunpack.c.l.b16 %v2035
    %v2203 = vunpack.c.l.b16 %v2036
    %v2204 = vunpack.c.l.b16 %v2037
    %v2205 = vunpack.c.l.b16 %v2038
    %v2206 = vunpack.c.l.b16 %v2039
    %v2207 = vunpack.c.l.b16 %v2040
    %v2208 = vunpack.c.l.b16 %v2041
    %v2209 = vunpack.c.l.b16 %v2042
    %v2210 = vunpack.c.l.b16 %v2043
    %v2211 = vunpack.c.l.b16 %v2044
    %v2212 = vunpack.c.l.b16 %v2045
    %v2213 = vunpack.c.l.b16 %v2046
    %v2214 = vunpack.c.l.b16 %v2047
    %v2215 = vunpack.c.l.b16 %v2048
    %v2216 = vunpack.c.l.b16 %v2049
    %v2217 = vunpack.c.l.b16 %v2050
    %v2218 = vunpack.c.l.b16 %v2051
    %v2219 = vunpack.c.l.b16 %v2052
    %v2220 = vunpack.c.l.b16 %v2053
    %v2221 = vunpack.c.l.b16 %v2054
    %v2222 = vunpack.c.l.b16 %v2055
    %v2223 = vunpack.c.l.b16 %v2056
    %v2224 = vunpack.c.l.b16 %v2057
    %v2225 = vunpack.c.l.b16 %v2058
    %v2226 = vunpack.c.l.b16 %v2059
    %v2227 = vunpack.c.l.b16 %v2060
    %v2228 = vunpack.c.l.b16 %v2061
    %v2229 = vunpack.c.l.b16 %v2062
    %v2230 = vunpack.c.l.b16 %v2063
    %v2231 = vunpack.c.l.b16 %v2064
    %v2232 = vunpack.c.l.b16 %v2065
    %v2233 = vunpack.c.l.b16 %v2066
    %v2234 = vunpack.c.l.b16 %v2067
    %v2235 = vunpack.c.l.b16 %v2068
    %v2236 = vunpack.c.l.b16 %v2069
    %v2237 = vunpack.c.l.b16 %v2070
    %v2238 = vunpack.c.l.b16 %v2071
    %v2239 = vunpack.c.l.b16 %v2072
    %v2240 = vunpack.c.l.b16 %v2073
    %v2241 = vunpack.c.l.b16 %v2074
    %v2242 = vunpack.c.l.b16 %v2075
    %v2243 = vunpack.c.l.b16 %v2076
    %v2244 = vunpack.c.l.b16 %v2077
    %v2245 = vunpack.c.l.b16 %v2078
    %v2246 = vunpack.c.l.b16 %v2079
    %v2247 = vunpack.c.l.b16 %v2080
    %v2248 = vunpack.c.l.b16 %v2081
    %v2249 = vunpack.c.l.b16 %v2082
    %v2250 = vunpack.c.l.b16 %v2083
    %v2251 = vunpack.c.l.b16 %v2084
    %v2252 = vunpack.c.l.b16 %v2085
    %v2253 = vunpack.c.l.b16 %v2086
    %v2254 = vunpack.c.l.b16 %v2087
    %v2255 = vunpack.c.l.b16 %v2088
    %v2256 = vunpack.c.l.b16 %v2089
    %v2257 = vunpack.c.l.b16 %v2090
    %v2258 = vunpack.c.l.b16 %v2091
    %v2259 = vunpack.c.l.b16 %v2092
    %v2260 = vunpack.c.l.b16 %v2093
    %v2261 = vunpack.c.l.b16 %v2094
    %v2262 = vunpack.c.l.b16 %v2095
    %v2263 = vunpack.c.l.b16 %v2096
    %v2264 = vunpack.c.l.b16 %v2097
    %v2265 = vpack.c.b16 %v2186, %v2185
    %v2266 = vpack.c.b16 %v2188, %v2187
    %v2267 = vpack.c.b16 %v2190, %v2189
    %v2268 = vpack.c.b16 %v2192, %v2191
    %v2269 = vpack.c.b16 %v2194, %v2193
    %v2270 = vpack.c.b16 %v2196, %v2195
    %v2271 = vpack.c.b16 %v2198, %v2197
    %v2272 = vpack.c.b16 %v2200, %v2199
    %v2273 = vpack.c.b16 %v2202, %v2201
    %v2274 = vpack.c.b16 %v2204, %v2203
    %v2275 = vpack.c.b16 %v2206, %v2205
    %v2276 = vpack.c.b16 %v2208, %v2207
    %v2277 = vpack.c.b16 %v2210, %v2209
    %v2278 = vpack.c.b16 %v2212, %v2211
    %v2279 = vpack.c.b16 %v2214, %v2213
    %v2280 = vpack.c.b16 %v2216, %v2215
    %v2281 = vpack.c.b16 %v2218, %v2217
    %v2282 = vpack.c.b16 %v2220, %v2219
    %v2283 = vpack.c.b16 %v2222, %v2221
    %v2284 = vpack.c.b16 %v2224, %v2223
    %v2285 = vpack.c.b16 %v2226, %v2225
    %v2286 = vpack.c.b16 %v2228, %v2227
    %v2287 = vpack.c.b16 %v2230, %v2229
    %v2288 = vpack.c.b16 %v2232, %v2231
    %v2289 = vpack.c.b16 %v2234, %v2233
    %v2290 = vpack.c.b16 %v2236, %v2235
    %v2291 = vpack.c.b16 %v2238, %v2237
    %v2292 = vpack.c.b16 %v2240, %v2239
    %v2293 = vpack.c.b16 %v2242, %v2241
    %v2294 = vpack.c.b16 %v2244, %v2243
    %v2295 = vpack.c.b16 %v2246, %v2245
    %v2296 = vpack.c.b16 %v2248, %v2247
    %v2297 = vpack.c.b16 %v2250, %v2249
    %v2298 = vpack.c.b16 %v2252, %v2251
    %v2299 = vpack.c.b16 %v2254, %v2253
    %v2300 = vpack.c.b16 %v2256, %v2255
    %v2301 = vpack.c.b16 %v2258, %v2257
    %v2302 = vpack.c.b16 %v2260, %v2259
    %v2303 = vpack.c.b16 %v2262, %v2261
    %v2304 = vpack.c.b16 %v2264, %v2263
    %2345 = vmatprep.subr.bf16.mxu0 0
    %2346 = vmatpush1.bf16.msra.mxu0 %v2265
    %2347 = vmatprep.subr.bf16.mxu0 0
    %2348 = vmatpush1.bf16.msra.mxu0 %v2266
    %2349 = vmatprep.subr.bf16.mxu0 0
    %2350 = vmatpush1.bf16.msra.mxu0 %v2267
    %2351 = vmatprep.subr.bf16.mxu0 0
    %2352 = vmatpush1.bf16.msra.mxu0 %v2268
    %2353 = vmatprep.subr.bf16.mxu0 0
    %2354 = vmatpush1.bf16.msra.mxu0 %v2269
    %2355 = vmatprep.subr.bf16.mxu0 0
    %2356 = vmatpush1.bf16.msra.mxu0 %v2270
    %2357 = vmatprep.subr.bf16.mxu0 0
    %2358 = vmatpush1.bf16.msra.mxu0 %v2271
    %2359 = vmatprep.subr.bf16.mxu0 0
    %2360 = vmatpush1.bf16.msra.mxu0 %v2272
    %2361 = vmatprep.subr.bf16.mxu0 0
    %2362 = vmatpush1.bf16.msra.mxu0 %v2273
    %2363 = vmatprep.subr.bf16.mxu0 0
    %2364 = vmatpush1.bf16.msra.mxu0 %v2274
    %2365 = vmatprep.subr.bf16.mxu0 0
    %2366 = vmatpush1.bf16.msra.mxu0 %v2275
    %2367 = vmatprep.subr.bf16.mxu0 0
    %2368 = vmatpush1.bf16.msra.mxu0 %v2276
    %2369 = vmatprep.subr.bf16.mxu0 0
    %2370 = vmatpush1.bf16.msra.mxu0 %v2277
    %2371 = vmatprep.subr.bf16.mxu0 0
    %2372 = vmatpush1.bf16.msra.mxu0 %v2278
    %2373 = vmatprep.subr.bf16.mxu0 0
    %2374 = vmatpush1.bf16.msra.mxu0 %v2279
    %2375 = vmatprep.subr.bf16.mxu0 0
    %2376 = vmatpush1.bf16.msra.mxu0 %v2280
    %2377 = vmatprep.mubr.bf16.mxu0 %v2014
    %2378 = vmatmul.mubr.bf16.gmra.mrb[0].mxu0 %v2013
    %v2379 = vpop.f32.mrb[0].mxu0
    %v2380 = vadd.f32 %v2103, %v2379
    %v2381 = vpop.f32.mrb[0].mxu0
    %v2382 = vpop.f32.mrb[0].mxu0
    %v2383 = vpop.f32.mrb[0].mxu0
    %2384 = vdwg.mxu0
    %2385 = vmatprep.subr.bf16.mxu0 0
    %2386 = vmatpush1.bf16.msra.mxu0 %v2281
    %2387 = vmatprep.subr.bf16.mxu0 0
    %2388 = vmatpush1.bf16.msra.mxu0 %v2282
    %2389 = vmatprep.subr.bf16.mxu0 0
    %2390 = vmatpush1.bf16.msra.mxu0 %v2283
    %2391 = vmatprep.subr.bf16.mxu0 0
    %2392 = vmatpush1.bf16.msra.mxu0 %v2284
    %2393 = vmatprep.subr.bf16.mxu0 0
    %2394 = vmatpush1.bf16.msra.mxu0 %v2285
    %2395 = vmatprep.subr.bf16.mxu0 0
    %2396 = vmatpush1.bf16.msra.mxu0 %v2286
    %2397 = vmatprep.subr.bf16.mxu0 0
    %2398 = vmatpush1.bf16.msra.mxu0 %v2287
    %2399 = vmatprep.subr.bf16.mxu0 0
    %2400 = vmatpush1.bf16.msra.mxu0 %v2288
    %2401 = vmatprep.subr.bf16.mxu0 0
    %2402 = vmatpush1.bf16.msra.mxu0 %v2289
    %2403 = vmatprep.subr.bf16.mxu0 0
    %2404 = vmatpush1.bf16.msra.mxu0 %v2290
    %2405 = vmatprep.subr.bf16.mxu0 0
    %2406 = vmatpush1.bf16.msra.mxu0 %v2291
    %2407 = vmatprep.subr.bf16.mxu0 0
    %2408 = vmatpush1.bf16.msra.mxu0 %v2292
    %2409 = vmatprep.subr.bf16.mxu0 0
    %2410 = vmatpush1.bf16.msra.mxu0 %v2293
    %2411 = vmatprep.subr.bf16.mxu0 0
    %2412 = vmatpush1.bf16.msra.mxu0 %v2294
    %2413 = vmatprep.subr.bf16.mxu0 0
    %2414 = vmatpush1.bf16.msra.mxu0 %v2295
    %2415 = vmatprep.subr.bf16.mxu0 0
    %2416 = vmatpush1.bf16.msra.mxu0 %v2296
    %2417 = vmatprep.mubr.bf16.mxu0 %v2016
    %2418 = vmatmul.mubr.bf16.gmra.mrb[0].mxu0 %v2015
    %v2419 = vpop.f32.mrb[0].mxu0
    %v2420 = vadd.f32 %v2380, %v2419
    %v2421 = vpop.f32.mrb[0].mxu0
    %v2422 = vpop.f32.mrb[0].mxu0
    %v2423 = vpop.f32.mrb[0].mxu0
    %2424 = vdwg.mxu0
    %2425 = vmatprep.subr.bf16.mxu0 0
    %2426 = vmatpush1.bf16.msra.mxu0 %v2297
    %2427 = vmatprep.subr.bf16.mxu0 0
    %2428 = vmatpush1.bf16.msra.mxu0 %v2298
    %2429 = vmatprep.subr.bf16.mxu0 0
    %2430 = vmatpush1.bf16.msra.mxu0 %v2299
    %2431 = vmatprep.subr.bf16.mxu0 0
    %2432 = vmatpush1.bf16.msra.mxu0 %v2300
    %2433 = vmatprep.subr.bf16.mxu0 0
    %2434 = vmatpush1.bf16.msra.mxu0 %v2301
    %2435 = vmatprep.subr.bf16.mxu0 0
    %2436 = vmatpush1.bf16.msra.mxu0 %v2302
    %2437 = vmatprep.subr.bf16.mxu0 0
    %2438 = vmatpush1.bf16.msra.mxu0 %v2303
    %2439 = vmatprep.subr.bf16.mxu0 0
    %2440 = vmatpush1.bf16.msra.mxu0 %v2304
    %2441 = vmatprep.subr.bf16.mxu0 0
    %2442 = vmatpush1.bf16.msra.mxu0 0
    %2443 = vmatprep.subr.bf16.mxu0 0
    %2444 = vmatpush1.bf16.msra.mxu0 0
    %2445 = vmatprep.subr.bf16.mxu0 0
    %2446 = vmatpush1.bf16.msra.mxu0 0
    %2447 = vmatprep.subr.bf16.mxu0 0
    %2448 = vmatpush1.bf16.msra.mxu0 0
    %2449 = vmatprep.subr.bf16.mxu0 0
    %2450 = vmatpush1.bf16.msra.mxu0 0
    %2451 = vmatprep.subr.bf16.mxu0 0
    %2452 = vmatpush1.bf16.msra.mxu0 0
    %2453 = vmatprep.subr.bf16.mxu0 0
    %2454 = vmatpush1.bf16.msra.mxu0 0
    %2455 = vmatprep.subr.bf16.mxu0 0
    %2456 = vmatpush1.bf16.msra.mxu0 0
    %2457 = vmatprep.mubr.bf16.mxu0 0
    %2458 = vmatmul.mubr.bf16.gmra.mrb[0].mxu0 %v2017
    %v2459 = vpop.f32.mrb[0].mxu0
    %v2460 = vadd.f32 %v2420, %v2459
    %v2461 = vpop.f32.mrb[0].mxu0
    %v2462 = vpop.f32.mrb[0].mxu0
    %v2463 = vpop.f32.mrb[0].mxu0
    %2464 = vdwg.mxu0
    %v2465 = vtanh.pop %v2460
    %v2466 = vpack.c.bf16 %v2465, %v2465
    %v2467 = vld [vmem:[%s5] sm:$0xf]
    %v2468 = vld [vmem:[%s5 + $0x4] sm:$0xf]
    %v2469 = vld [vmem:[%s5 + $0x8] sm:$0xf]
    %v2470 = vld [vmem:[%s5 + $0xc] sm:$0xf]
    %v2471 = vld [vmem:[%s5 + $0x10] sm:$0xf]
    %v2472 = vld [vmem:[%s5 + $0x14] sm:$0xf]
    %v2473 = vld [vmem:[%s5 + $0x18] sm:$0xf]
    %v2474 = vld [vmem:[%s5 + $0x1c] sm:$0xf]
    %v2475 = vld [vmem:[%s5 + $0x20] sm:$0xf]
    %v2476 = vld [vmem:[%s5 + $0x24] sm:$0xf]
    %v2477 = vld [vmem:[%s5 + $0x28] sm:$0xf]
    %v2478 = vld [vmem:[%s5 + $0x2c] sm:$0xf]
    %v2479 = vld [vmem:[%s5 + $0x30] sm:$0xf]
    %v2480 = vld [vmem:[%s5 + $0x34] sm:$0xf]
    %v2481 = vld [vmem:[%s5 + $0x38] sm:$0xf]
    %v2482 = vld [vmem:[%s5 + $0x3c] sm:$0xf]
    %v2483 = vld [vmem:[%s6] sm:$0x1]
    %v2485 = vlaneseq
    %v2486 = vshrl.u32 %v2485, 7
    %v2487 = vsub.s32 0, %v2486
    %v2488 = vrot.slane %v2483, %v2487
    %v2506 = vunpack.c.l.b16 %v2467
    %v2507 = vunpack.c.l.b16 %v2468
    %v2508 = vunpack.c.l.b16 %v2469
    %v2509 = vunpack.c.l.b16 %v2470
    %v2510 = vunpack.c.l.b16 %v2471
    %v2511 = vunpack.c.l.b16 %v2472
    %v2512 = vunpack.c.l.b16 %v2473
    %v2513 = vunpack.c.l.b16 %v2474
    %v2514 = vunpack.c.l.b16 %v2475
    %v2515 = vunpack.c.l.b16 %v2476
    %v2516 = vunpack.c.l.b16 %v2477
    %v2517 = vunpack.c.l.b16 %v2478
    %v2518 = vunpack.c.l.b16 %v2479
    %v2519 = vunpack.c.l.b16 %v2480
    %v2520 = vunpack.c.l.b16 %v2481
    %v2521 = vunpack.c.l.b16 %v2482
    %v2522 = vpack.c.b16 %v2507, %v2506
    %v2523 = vpack.c.b16 %v2509, %v2508
    %v2524 = vpack.c.b16 %v2511, %v2510
    %v2525 = vpack.c.b16 %v2513, %v2512
    %v2526 = vpack.c.b16 %v2515, %v2514
    %v2527 = vpack.c.b16 %v2517, %v2516
    %v2528 = vpack.c.b16 %v2519, %v2518
    %v2529 = vpack.c.b16 %v2521, %v2520
    %2538 = vmatprep.subr.bf16.mxu0 0
    %2539 = vmatpush1.bf16.msra.mxu0 %v2522
    %2540 = vmatprep.subr.bf16.mxu0 0
    %2541 = vmatpush1.bf16.msra.mxu0 %v2523
    %2542 = vmatprep.subr.bf16.mxu0 0
    %2543 = vmatpush1.bf16.msra.mxu0 %v2524
    %2544 = vmatprep.subr.bf16.mxu0 0
    %2545 = vmatpush1.bf16.msra.mxu0 %v2525
    %2546 = vmatprep.subr.bf16.mxu0 0
    %2547 = vmatpush1.bf16.msra.mxu0 %v2526
    %2548 = vmatprep.subr.bf16.mxu0 0
    %2549 = vmatpush1.bf16.msra.mxu0 %v2527
    %2550 = vmatprep.subr.bf16.mxu0 0
    %2551 = vmatpush1.bf16.msra.mxu0 %v2528
    %2552 = vmatprep.subr.bf16.mxu0 0
    %2553 = vmatpush1.bf16.msra.mxu0 %v2529
    %2554 = vmatprep.subr.bf16.mxu0 0
    %2555 = vmatpush1.bf16.msra.mxu0 0
    %2556 = vmatprep.subr.bf16.mxu0 0
    %2557 = vmatpush1.bf16.msra.mxu0 0
    %2558 = vmatprep.subr.bf16.mxu0 0
    %2559 = vmatpush1.bf16.msra.mxu0 0
    %2560 = vmatprep.subr.bf16.mxu0 0
    %2561 = vmatpush1.bf16.msra.mxu0 0
    %2562 = vmatprep.subr.bf16.mxu0 0
    %2563 = vmatpush1.bf16.msra.mxu0 0
    %2564 = vmatprep.subr.bf16.mxu0 0
    %2565 = vmatpush1.bf16.msra.mxu0 0
    %2566 = vmatprep.subr.bf16.mxu0 0
    %2567 = vmatpush1.bf16.msra.mxu0 0
    %2568 = vmatprep.subr.bf16.mxu0 0
    %2569 = vmatpush1.bf16.msra.mxu0 0
    %2570 = vmatprep.mubr.bf16.mxu0 0
    %2571 = vmatmul.mubr.bf16.gmra.mrb[0].mxu0 %v2466
    %v2572 = vpop.f32.mrb[0].mxu0
    %v2573 = vadd.f32 %v2488, %v2572
    %v2574 = vpop.f32.mrb[0].mxu0
    %v2575 = vpop.f32.mrb[0].mxu0
    %v2576 = vpop.f32.mrb[0].mxu0
    %2577 = vdwg.mxu0
    %2578 = vst [vmem:[%s7] sm:$0xff] %v2573
    // Predicated region
    $region38: #{lenet_forward_pallas.1} parent=1 // pred_check
      _
    $region39: #{lenet_forward_pallas.1} parent=1 // pred_check_branch
      %2580 = sbr.rel (0) target = $region41
    $region40: #{lenet_forward_pallas.1} parent=1 // pred_region
      _
    $region41: #{lenet_forward_pallas.1} parent=1 // pred_fallthru
      _
    // Predicated region
    $region42: #{lenet_forward_pallas.1} parent=1 // pred_check
      _
    $region43: #{lenet_forward_pallas.1} parent=1 // pred_check_branch
      %2582 = sbr.rel (0) target = $region45
    $region44: #{lenet_forward_pallas.1} parent=1 // pred_region
      _
    $region45: #{lenet_forward_pallas.1} parent=1 // pred_fallthru
      _
    %2583 = vsyncpa [#allocation3], 1
    %2584 = vsyncpa [#allocation5], 1

</llo_original>
